<compile_context>
chip_gen: v6e
topology: v6e:2x2x1
jax: 0.10.0
libtpu: 0.0.40
codegen_flags: <defaults>
</compile_context>

<pallas_src>
import jax
import jax.numpy as jnp
import numpy as np
from jax.experimental import pallas as pl
from jax.experimental.pallas import tpu as pltpu


def pygmpnet_kernel(adj_ref, pool_ref, x_ref,
                    w_emb_ref, b_emb_ref,
                    gcn_w_ref, gcn_b_ref,
                    wr0_ref, br0_ref, wr1_ref, br1_ref, wr2_ref, br2_ref,
                    out_ref,
                    h0_ref, h1_ref, xg_ref):
    f32 = jnp.float32
    bf16 = jnp.bfloat16
    layer = pl.program_id(0)
    tile = pl.program_id(1)
    n_layers = pl.num_programs(0)
    n_tiles = pl.num_programs(1)
    tile_n = adj_ref.shape[0]
    last_layer = layer == n_layers - 1

    # ---- one-time init: embedding h0 = x @ W_emb + b (dropout = identity in eval),
    #      and zero the pooled-sum accumulator ----
    @pl.when((layer == 0) & (tile == 0))
    def _():
        h0_ref[...] = (jnp.dot(x_ref[...], w_emb_ref[...],
                               preferred_element_type=f32) + b_emb_ref[...])
        xg_ref[...] = jnp.zeros_like(xg_ref)

    row0 = pl.multiple_of(tile * tile_n, tile_n)
    rows = pl.ds(row0, tile_n)

    # ---- per node-row tile GCN update (balanced across tiles):
    #      h_new = relu((A_tile @ h_src) @ W_l + b_l) + h_src[rows]  -> h_dst[rows]
    def layer_tile(src_ref, dst_ref):
        agg = jnp.dot(adj_ref[...], src_ref[...].astype(bf16),
                      preferred_element_type=f32)                   # (tile_n, H)
        agg = jnp.dot(agg.astype(bf16), gcn_w_ref[0],
                      preferred_element_type=f32) + gcn_b_ref[0]    # (tile_n, H)
        h_new = jnp.maximum(agg, 0.0) + src_ref[rows, :]            # relu + residual
        dst_ref[rows, :] = h_new

        # mean readout folded into the final layer's tile loop
        @pl.when(last_layer)
        def _():
            xg_ref[...] += jnp.dot(pool_ref[...], h_new,
                                   preferred_element_type=f32)

    # static ping-pong buffer selection (no dynamic ref indexing)
    @pl.when(layer % 2 == 0)
    def _():
        layer_tile(h0_ref, h1_ref)

    @pl.when(layer % 2 == 1)
    def _():
        layer_tile(h1_ref, h0_ref)

    # ---- MLPReadout (L=2) on the very last grid step ----
    @pl.when(last_layer & (tile == n_tiles - 1))
    def _():
        y = jnp.maximum(
            jnp.dot(xg_ref[...], wr0_ref[...], preferred_element_type=f32) + br0_ref[...],
            0.0)
        y = jnp.maximum(
            jnp.dot(y, wr1_ref[...], preferred_element_type=f32) + br1_ref[...],
            0.0)
        out_ref[...] = jnp.dot(y, wr2_ref[...], preferred_element_type=f32) + br2_ref[...]


def pygmpnet_forward(x, adj, pool, params, *, tile_n=128):
    (w_emb, b_emb, gcn_w, gcn_b, wr0, br0, wr1, br1, wr2, br2) = params
    N = adj.shape[0]
    G = pool.shape[0]
    H = w_emb.shape[1]
    out_dim = wr2.shape[1]
    n_layers = gcn_w.shape[0]
    assert N % tile_n == 0, "pad node count to a multiple of tile_n"
    n_tiles = N // tile_n

    def const_spec(a):
        nd = a.ndim
        return pl.BlockSpec(a.shape, lambda *_: (0,) * nd)   # resident, DMA'd once

    grid_spec = pltpu.PrefetchScalarGridSpec(
        num_scalar_prefetch=0,
        grid=(n_layers, n_tiles),
        in_specs=[
            pl.BlockSpec((tile_n, N), lambda l, i: (i, 0)),   # adj row-tile stream (bf16)
            pl.BlockSpec((G, tile_n), lambda l, i: (0, i)),   # pool column-tile stream
            const_spec(x),                                    # node features (resident)
            const_spec(w_emb), const_spec(b_emb),
            pl.BlockSpec((1, H, H), lambda l, i: (l, 0, 0)),  # per-layer GCN weight
            pl.BlockSpec((1, 1, H), lambda l, i: (l, 0, 0)),  # per-layer GCN bias
            const_spec(wr0), const_spec(br0),
            const_spec(wr1), const_spec(br1),
            const_spec(wr2), const_spec(br2),
        ],
        out_specs=pl.BlockSpec((G, out_dim), lambda l, i: (0, 0)),
        scratch_shapes=[
            pltpu.VMEM((N, H), jnp.float32),    # ping-pong node features, buffer 0
            pltpu.VMEM((N, H), jnp.float32),    # ping-pong node features, buffer 1
            pltpu.VMEM((G, H), jnp.float32),    # per-graph pooled sums
        ],
    )
    return pl.pallas_call(
        pygmpnet_kernel,
        out_shape=jax.ShapeDtypeStruct((G, out_dim), jnp.float32),
        grid_spec=grid_spec,
        compiler_params=pltpu.CompilerParams(
            # Both axes "arbitrary": h / xg accumulators live in per-core VMEM
            # scratch, so the whole grid must stay on one TensorCore.
            dimension_semantics=("arbitrary", "arbitrary"),
            vmem_limit_bytes=32 * 1024 * 1024,
        ),
    )(adj, pool, x, w_emb, b_emb, gcn_w, gcn_b, wr0, br0, wr1, br1, wr2, br2)


def _linear_params(key, fan_in, fan_out):
    """Deterministic PyTorch-Linear-style init (uniform in +-1/sqrt(fan_in))."""
    kw, kb = jax.random.split(key)
    bound = 1.0 / np.sqrt(fan_in)
    w = jax.random.uniform(kw, (fan_in, fan_out), jnp.float32, -bound, bound)
    b = jax.random.uniform(kb, (1, fan_out), jnp.float32, -bound, bound)
    return w, b


def build_dense_graph(num_graphs, nodes_per_graph):
    """Ring graphs; returns gcn-normalized dense adjacency + mean-pool matrix."""
    N = num_graphs * nodes_per_graph
    src, dst = [], []
    for g in range(num_graphs):
        off = g * nodes_per_graph
        for i in range(nodes_per_graph):
            j = (i + 1) % nodes_per_graph
            src += [off + i, off + j]
            dst += [off + j, off + i]
    src = np.asarray(src)
    dst = np.asarray(dst)
    deg = np.zeros(N, np.float32)
    np.add.at(deg, dst, 1.0)
    dis = np.where(deg > 0, 1.0 / np.sqrt(np.maximum(deg, 1e-12)), 0.0)
    adj = np.zeros((N, N), np.float32)
    for s, d in zip(src, dst):
        adj[d, s] += dis[s] * dis[d]     # A_hat[dst, src] = d^-1/2[src] * d^-1/2[dst]
    batch = np.repeat(np.arange(num_graphs), nodes_per_graph)
    pool = np.zeros((num_graphs, N), np.float32)
    for g in range(num_graphs):
        mask = batch == g
        pool[g, mask] = 1.0 / mask.sum()
    return jnp.asarray(adj), jnp.asarray(pool)


def reference_forward(x, adj, pool, params):
    (w_emb, b_emb, gcn_w, gcn_b, wr0, br0, wr1, br1, wr2, br2) = params
    hi = jax.lax.Precision.HIGHEST
    mm = lambda a, b: jnp.dot(a, b, precision=hi)
    h = mm(x, w_emb) + b_emb
    for l in range(gcn_w.shape[0]):
        h = jnp.maximum(mm(adj, mm(h, gcn_w[l])) + gcn_b[l], 0.0) + h
    xg = mm(pool, h)
    y = jnp.maximum(mm(xg, wr0) + br0, 0.0)
    y = jnp.maximum(mm(y, wr1) + br1, 0.0)
    return mm(y, wr2) + br2


if __name__ == "__main__":
    num_graphs, nodes_per_graph = 4, 64
    N = num_graphs * nodes_per_graph            # 256 nodes -> two 128-row tiles
    input_dim, hidden_dim, output_dim = 16, 128, 8

    key = jax.random.PRNGKey(0)
    keys = jax.random.split(key, 8)

    x = jax.random.normal(keys[0], (N, input_dim), jnp.float32)
    adj, pool = build_dense_graph(num_graphs, nodes_per_graph)

    # embedding_h
    w_emb, b_emb = _linear_params(keys[1], input_dim, hidden_dim)
    # two GCNConv layers (lin weight, bias added post-aggregation), stacked per layer
    w0, b0 = _linear_params(keys[2], hidden_dim, hidden_dim)
    w1, b1 = _linear_params(keys[3], hidden_dim, hidden_dim)
    gcn_w = jnp.stack([w0, w1])                 # (L, H, H)
    gcn_b = jnp.stack([b0, b1])                 # (L, 1, H)
    # MLPReadout: hidden -> hidden//2 -> hidden//4 -> output_dim
    wr0, br0 = _linear_params(keys[4], hidden_dim, hidden_dim // 2)
    wr1, br1 = _linear_params(keys[5], hidden_dim // 2, hidden_dim // 4)
    wr2, br2 = _linear_params(keys[6], hidden_dim // 4, output_dim)

    # bf16 for the MXU-heavy operands (aggregation + feature matmuls), f32 accumulate.
    bf16 = jnp.bfloat16
    x_bf = x.astype(bf16)
    adj_bf = adj.astype(bf16)
    w_emb_bf = w_emb.astype(bf16)
    gcn_w_bf = gcn_w.astype(bf16)

    params = (w_emb_bf, b_emb, gcn_w_bf, gcn_b, wr0, br0, wr1, br1, wr2, br2)
    pred = pygmpnet_forward(x_bf, adj_bf, pool, params, tile_n=128)
    jax.block_until_ready(pred)

    # f32 reference using the same (bf16-quantized) parameters; remaining mismatch is
    # only the in-kernel bf16 rounding of the activations -> relaxed tolerance.
    ref_params = (w_emb_bf.astype(jnp.float32), b_emb,
                  gcn_w_bf.astype(jnp.float32), gcn_b,
                  wr0, br0, wr1, br1, wr2, br2)
    ref = reference_forward(x_bf.astype(jnp.float32), adj_bf.astype(jnp.float32),
                            pool, ref_params)
    np.testing.assert_allclose(np.asarray(pred), np.asarray(ref), rtol=2e-2, atol=2e-2)

    print("KERNEL_OK")
</pallas_src>

<mosaic_0001>
module attributes {stable_mosaic.version = 11 : i64} {
  func.func @pygmpnet_kernel(%arg0: i32, %arg1: i32, %arg2: memref<128x256xbf16, #tpu.memory_space<vmem>>, %arg3: memref<4x128xf32, #tpu.memory_space<vmem>>, %arg4: memref<256x16xbf16, #tpu.memory_space<vmem>>, %arg5: memref<16x128xbf16, #tpu.memory_space<vmem>>, %arg6: memref<1x128xf32, #tpu.memory_space<vmem>>, %arg7: memref<1x128x128xbf16, #tpu.memory_space<vmem>>, %arg8: memref<1x1x128xf32, #tpu.memory_space<vmem>>, %arg9: memref<128x64xf32, #tpu.memory_space<vmem>>, %arg10: memref<1x64xf32, #tpu.memory_space<vmem>>, %arg11: memref<64x32xf32, #tpu.memory_space<vmem>>, %arg12: memref<1x32xf32, #tpu.memory_space<vmem>>, %arg13: memref<32x8xf32, #tpu.memory_space<vmem>>, %arg14: memref<1x8xf32, #tpu.memory_space<vmem>>, %arg15: memref<4x8xf32, #tpu.memory_space<vmem>>, %arg16: memref<256x128xf32, #tpu.memory_space<vmem>>, %arg17: memref<256x128xf32, #tpu.memory_space<vmem>>, %arg18: memref<4x128xf32, #tpu.memory_space<vmem>>) attributes {dimension_semantics = [#tpu.dimension_semantics<arbitrary>, #tpu.dimension_semantics<arbitrary>], iteration_bounds = array<i64: 2, 2>, scalar_prefetch = 0 : i64, scratch_operands = 3 : i64, tpu.core_type = #tpu.core_type<tc>, window_params = [{transform_indices = @transform_0, window_bounds = array<i64: 128, 256>}, {transform_indices = @transform_1, window_bounds = array<i64: 4, 128>}, {pipeline_mode = #tpu.pipeline_mode<synchronous>, transform_indices = @transform_2, window_bounds = array<i64: 256, 16>}, {pipeline_mode = #tpu.pipeline_mode<synchronous>, transform_indices = @transform_3, window_bounds = array<i64: 16, 128>}, {pipeline_mode = #tpu.pipeline_mode<synchronous>, transform_indices = @transform_4, window_bounds = array<i64: 1, 128>}, {transform_indices = @transform_5, window_bounds = array<i64: 1, 128, 128>}, {transform_indices = @transform_6, window_bounds = array<i64: 1, 1, 128>}, {pipeline_mode = #tpu.pipeline_mode<synchronous>, transform_indices = @transform_7, window_bounds = array<i64: 128, 64>}, {pipeline_mode = #tpu.pipeline_mode<synchronous>, transform_indices = @transform_8, window_bounds = array<i64: 1, 64>}, {pipeline_mode = #tpu.pipeline_mode<synchronous>, transform_indices = @transform_9, window_bounds = array<i64: 64, 32>}, {pipeline_mode = #tpu.pipeline_mode<synchronous>, transform_indices = @transform_10, window_bounds = array<i64: 1, 32>}, {pipeline_mode = #tpu.pipeline_mode<synchronous>, transform_indices = @transform_11, window_bounds = array<i64: 32, 8>}, {pipeline_mode = #tpu.pipeline_mode<synchronous>, transform_indices = @transform_12, window_bounds = array<i64: 1, 8>}, {pipeline_mode = #tpu.pipeline_mode<synchronous>, transform_indices = @transform_13, window_bounds = array<i64: 4, 8>}]} {
    %c1_i32 = arith.constant 1 : i32
    %0 = arith.cmpi eq, %arg0, %c1_i32 : i32
    %c0_i32 = arith.constant 0 : i32
    %1 = arith.cmpi eq, %arg0, %c0_i32 : i32
    %c0_i32_0 = arith.constant 0 : i32
    %2 = arith.cmpi eq, %arg1, %c0_i32_0 : i32
    %3 = arith.andi %1, %2 : i1
    %4 = arith.extui %3 : i1 to i32
    %c0_i32_1 = arith.constant 0 : i32
    %5 = arith.cmpi ne, %4, %c0_i32_1 : i32
    scf.if %5 {
      %c0 = arith.constant 0 : index
      %c0_19 = arith.constant 0 : index
      %38 = vector.load %arg4[%c0, %c0_19] : memref<256x16xbf16, #tpu.memory_space<vmem>>, vector<256x16xbf16>
      %c0_20 = arith.constant 0 : index
      %c0_21 = arith.constant 0 : index
      %39 = vector.load %arg5[%c0_20, %c0_21] : memref<16x128xbf16, #tpu.memory_space<vmem>>, vector<16x128xbf16>
      %cst = arith.constant dense<0.000000e+00> : vector<256x128xf32>
      %40 = tpu.matmul %38, %39, %cst {dimension_numbers = #tpu.dot_dimension_numbers<[1], [0], [0], [1], [0, 0, 1, 1], [], []>} : vector<256x16xbf16>, vector<16x128xbf16>, vector<256x128xf32> -> vector<256x128xf32>
      %c0_22 = arith.constant 0 : index
      %c0_23 = arith.constant 0 : index
      %41 = vector.load %arg6[%c0_22, %c0_23] : memref<1x128xf32, #tpu.memory_space<vmem>>, vector<1x128xf32>
      %42 = vector.broadcast %41 : vector<1x128xf32> to vector<256x128xf32>
      %43 = arith.addf %40, %42 : vector<256x128xf32>
      %c0_24 = arith.constant 0 : index
      %c0_25 = arith.constant 0 : index
      %44 = vector.load %arg16[%c0_24, %c0_25] : memref<256x128xf32, #tpu.memory_space<vmem>>, vector<256x128xf32>
      tpu.vector_store %arg16[%c0_24, %c0_25], %43 {strides = array<i32>} : memref<256x128xf32, #tpu.memory_space<vmem>>, vector<256x128xf32>,
      %cst_26 = arith.constant 0.000000e+00 : f32
      %45 = vector.broadcast %cst_26 : f32 to vector<4x128xf32>
      %c0_27 = arith.constant 0 : index
      %c0_28 = arith.constant 0 : index
      %46 = vector.load %arg18[%c0_27, %c0_28] : memref<4x128xf32, #tpu.memory_space<vmem>>, vector<4x128xf32>
      tpu.vector_store %arg18[%c0_27, %c0_28], %45 {strides = array<i32>} : memref<4x128xf32, #tpu.memory_space<vmem>>, vector<4x128xf32>,
    } else {
    }
    %c128_i32 = arith.constant 128 : i32
    %6 = arith.muli %arg1, %c128_i32 : i32
    %7 = tpu.assume_multiple %6, 128 : i32
    %c2_i32 = arith.constant 2 : i32
    %c0_i32_2 = arith.constant 0 : i32
    %8 = arith.cmpi eq, %c2_i32, %c0_i32_2 : i32
    %c1_i32_3 = arith.constant 1 : i32
    %9 = arith.select %8, %c1_i32_3, %c2_i32 : i32
    %10 = arith.remsi %arg0, %9 : i32
    %c0_i32_4 = arith.constant 0 : i32
    %11 = arith.cmpi ne, %10, %c0_i32_4 : i32
    %c0_i32_5 = arith.constant 0 : i32
    %12 = arith.cmpi slt, %10, %c0_i32_5 : i32
    %c0_i32_6 = arith.constant 0 : i32
    %13 = arith.cmpi slt, %9, %c0_i32_6 : i32
    %14 = arith.xori %12, %13 : i1
    %15 = arith.andi %14, %11 : i1
    %16 = arith.addi %10, %9 : i32
    %17 = arith.select %15, %16, %10 : i32
    %c0_i32_7 = arith.constant 0 : i32
    %18 = arith.cmpi eq, %17, %c0_i32_7 : i32
    %19 = arith.extui %18 : i1 to i32
    %c0_i32_8 = arith.constant 0 : i32
    %20 = arith.cmpi ne, %19, %c0_i32_8 : i32
    scf.if %20 {
      %c0 = arith.constant 0 : index
      %c0_19 = arith.constant 0 : index
      %38 = vector.load %arg2[%c0, %c0_19] : memref<128x256xbf16, #tpu.memory_space<vmem>>, vector<128x256xbf16>
      %c0_20 = arith.constant 0 : index
      %c0_21 = arith.constant 0 : index
      %39 = vector.load %arg16[%c0_20, %c0_21] : memref<256x128xf32, #tpu.memory_space<vmem>>, vector<256x128xf32>
      %40 = arith.truncf %39 : vector<256x128xf32> to vector<256x128xbf16>
      %cst = arith.constant dense<0.000000e+00> : vector<128x128xf32>
      %41 = tpu.matmul %38, %40, %cst {dimension_numbers = #tpu.dot_dimension_numbers<[1], [0], [0], [1], [0, 0, 1, 1], [], []>} : vector<128x256xbf16>, vector<256x128xbf16>, vector<128x128xf32> -> vector<128x128xf32>
      %42 = arith.truncf %41 : vector<128x128xf32> to vector<128x128xbf16>
      %c0_22 = arith.constant 0 : index
      %c0_23 = arith.constant 0 : index
      %c0_24 = arith.constant 0 : index
      %43 = vector.load %arg7[%c0_22, %c0_23, %c0_24] : memref<1x128x128xbf16, #tpu.memory_space<vmem>>, vector<1x128x128xbf16>
      %44 = vector.shape_cast %43 : vector<1x128x128xbf16> to vector<128x128xbf16>
      %cst_25 = arith.constant dense<0.000000e+00> : vector<128x128xf32>
      %45 = tpu.matmul %42, %44, %cst_25 {dimension_numbers = #tpu.dot_dimension_numbers<[1], [0], [0], [1], [0, 0, 1, 1], [], []>} : vector<128x128xbf16>, vector<128x128xbf16>, vector<128x128xf32> -> vector<128x128xf32>
      %c0_26 = arith.constant 0 : index
      %c0_27 = arith.constant 0 : index
      %c0_28 = arith.constant 0 : index
      %46 = vector.load %arg8[%c0_26, %c0_27, %c0_28] : memref<1x1x128xf32, #tpu.memory_space<vmem>>, vector<1x1x128xf32>
      %47 = vector.shape_cast %46 : vector<1x1x128xf32> to vector<1x128xf32>
      %48 = vector.broadcast %47 : vector<1x128xf32> to vector<128x128xf32>
      %49 = arith.addf %45, %48 : vector<128x128xf32>
      %cst_29 = arith.constant 0.000000e+00 : f32
      %50 = vector.broadcast %cst_29 : f32 to vector<128x128xf32>
      %51 = arith.maximumf %49, %50 : vector<128x128xf32>
      %52 = arith.index_cast %7 : i32 to index
      %c0_30 = arith.constant 0 : index
      %53 = vector.load %arg16[%52, %c0_30] : memref<256x128xf32, #tpu.memory_space<vmem>>, vector<128x128xf32>
      %54 = arith.addf %51, %53 : vector<128x128xf32>
      %55 = arith.index_cast %7 : i32 to index
      %c0_31 = arith.constant 0 : index
      %56 = vector.load %arg17[%55, %c0_31] : memref<256x128xf32, #tpu.memory_space<vmem>>, vector<128x128xf32>
      tpu.vector_store %arg17[%55, %c0_31], %54 {strides = array<i32>} : memref<256x128xf32, #tpu.memory_space<vmem>>, vector<128x128xf32>,
      %57 = arith.extui %0 : i1 to i32
      %c0_i32_32 = arith.constant 0 : i32
      %58 = arith.cmpi ne, %57, %c0_i32_32 : i32
      scf.if %58 {
        %c0_33 = arith.constant 0 : index
        %c0_34 = arith.constant 0 : index
        %59 = vector.load %arg18[%c0_33, %c0_34] : memref<4x128xf32, #tpu.memory_space<vmem>>, vector<4x128xf32>
        %c0_35 = arith.constant 0 : index
        %c0_36 = arith.constant 0 : index
        %60 = vector.load %arg3[%c0_35, %c0_36] : memref<4x128xf32, #tpu.memory_space<vmem>>, vector<4x128xf32>
        %cst_37 = arith.constant dense<0.000000e+00> : vector<4x128xf32>
        %61 = tpu.matmul %60, %54, %cst_37 {dimension_numbers = #tpu.dot_dimension_numbers<[1], [0], [0], [1], [0, 0, 1, 1], [], []>} : vector<4x128xf32>, vector<128x128xf32>, vector<4x128xf32> -> vector<4x128xf32>
        %62 = arith.addf %59, %61 : vector<4x128xf32>
        %c0_38 = arith.constant 0 : index
        %c0_39 = arith.constant 0 : index
        %63 = vector.load %arg18[%c0_38, %c0_39] : memref<4x128xf32, #tpu.memory_space<vmem>>, vector<4x128xf32>
        tpu.vector_store %arg18[%c0_38, %c0_39], %62 {strides = array<i32>} : memref<4x128xf32, #tpu.memory_space<vmem>>, vector<4x128xf32>,
      } else {
      }
    } else {
    }
    %c2_i32_9 = arith.constant 2 : i32
    %c0_i32_10 = arith.constant 0 : i32
    %21 = arith.cmpi eq, %c2_i32_9, %c0_i32_10 : i32
    %c1_i32_11 = arith.constant 1 : i32
    %22 = arith.select %21, %c1_i32_11, %c2_i32_9 : i32
    %23 = arith.remsi %arg0, %22 : i32
    %c0_i32_12 = arith.constant 0 : i32
    %24 = arith.cmpi ne, %23, %c0_i32_12 : i32
    %c0_i32_13 = arith.constant 0 : i32
    %25 = arith.cmpi slt, %23, %c0_i32_13 : i32
    %c0_i32_14 = arith.constant 0 : i32
    %26 = arith.cmpi slt, %22, %c0_i32_14 : i32
    %27 = arith.xori %25, %26 : i1
    %28 = arith.andi %27, %24 : i1
    %29 = arith.addi %23, %22 : i32
    %30 = arith.select %28, %29, %23 : i32
    %c1_i32_15 = arith.constant 1 : i32
    %31 = arith.cmpi eq, %30, %c1_i32_15 : i32
    %32 = arith.extui %31 : i1 to i32
    %c0_i32_16 = arith.constant 0 : i32
    %33 = arith.cmpi ne, %32, %c0_i32_16 : i32
    scf.if %33 {
      %c0 = arith.constant 0 : index
      %c0_19 = arith.constant 0 : index
      %38 = vector.load %arg2[%c0, %c0_19] : memref<128x256xbf16, #tpu.memory_space<vmem>>, vector<128x256xbf16>
      %c0_20 = arith.constant 0 : index
      %c0_21 = arith.constant 0 : index
      %39 = vector.load %arg17[%c0_20, %c0_21] : memref<256x128xf32, #tpu.memory_space<vmem>>, vector<256x128xf32>
      %40 = arith.truncf %39 : vector<256x128xf32> to vector<256x128xbf16>
      %cst = arith.constant dense<0.000000e+00> : vector<128x128xf32>
      %41 = tpu.matmul %38, %40, %cst {dimension_numbers = #tpu.dot_dimension_numbers<[1], [0], [0], [1], [0, 0, 1, 1], [], []>} : vector<128x256xbf16>, vector<256x128xbf16>, vector<128x128xf32> -> vector<128x128xf32>
      %42 = arith.truncf %41 : vector<128x128xf32> to vector<128x128xbf16>
      %c0_22 = arith.constant 0 : index
      %c0_23 = arith.constant 0 : index
      %c0_24 = arith.constant 0 : index
      %43 = vector.load %arg7[%c0_22, %c0_23, %c0_24] : memref<1x128x128xbf16, #tpu.memory_space<vmem>>, vector<1x128x128xbf16>
      %44 = vector.shape_cast %43 : vector<1x128x128xbf16> to vector<128x128xbf16>
      %cst_25 = arith.constant dense<0.000000e+00> : vector<128x128xf32>
      %45 = tpu.matmul %42, %44, %cst_25 {dimension_numbers = #tpu.dot_dimension_numbers<[1], [0], [0], [1], [0, 0, 1, 1], [], []>} : vector<128x128xbf16>, vector<128x128xbf16>, vector<128x128xf32> -> vector<128x128xf32>
      %c0_26 = arith.constant 0 : index
      %c0_27 = arith.constant 0 : index
      %c0_28 = arith.constant 0 : index
      %46 = vector.load %arg8[%c0_26, %c0_27, %c0_28] : memref<1x1x128xf32, #tpu.memory_space<vmem>>, vector<1x1x128xf32>
      %47 = vector.shape_cast %46 : vector<1x1x128xf32> to vector<1x128xf32>
      %48 = vector.broadcast %47 : vector<1x128xf32> to vector<128x128xf32>
      %49 = arith.addf %45, %48 : vector<128x128xf32>
      %cst_29 = arith.constant 0.000000e+00 : f32
      %50 = vector.broadcast %cst_29 : f32 to vector<128x128xf32>
      %51 = arith.maximumf %49, %50 : vector<128x128xf32>
      %52 = arith.index_cast %7 : i32 to index
      %c0_30 = arith.constant 0 : index
      %53 = vector.load %arg17[%52, %c0_30] : memref<256x128xf32, #tpu.memory_space<vmem>>, vector<128x128xf32>
      %54 = arith.addf %51, %53 : vector<128x128xf32>
      %55 = arith.index_cast %7 : i32 to index
      %c0_31 = arith.constant 0 : index
      %56 = vector.load %arg16[%55, %c0_31] : memref<256x128xf32, #tpu.memory_space<vmem>>, vector<128x128xf32>
      tpu.vector_store %arg16[%55, %c0_31], %54 {strides = array<i32>} : memref<256x128xf32, #tpu.memory_space<vmem>>, vector<128x128xf32>,
      %57 = arith.extui %0 : i1 to i32
      %c0_i32_32 = arith.constant 0 : i32
      %58 = arith.cmpi ne, %57, %c0_i32_32 : i32
      scf.if %58 {
        %c0_33 = arith.constant 0 : index
        %c0_34 = arith.constant 0 : index
        %59 = vector.load %arg18[%c0_33, %c0_34] : memref<4x128xf32, #tpu.memory_space<vmem>>, vector<4x128xf32>
        %c0_35 = arith.constant 0 : index
        %c0_36 = arith.constant 0 : index
        %60 = vector.load %arg3[%c0_35, %c0_36] : memref<4x128xf32, #tpu.memory_space<vmem>>, vector<4x128xf32>
        %cst_37 = arith.constant dense<0.000000e+00> : vector<4x128xf32>
        %61 = tpu.matmul %60, %54, %cst_37 {dimension_numbers = #tpu.dot_dimension_numbers<[1], [0], [0], [1], [0, 0, 1, 1], [], []>} : vector<4x128xf32>, vector<128x128xf32>, vector<4x128xf32> -> vector<4x128xf32>
        %62 = arith.addf %59, %61 : vector<4x128xf32>
        %c0_38 = arith.constant 0 : index
        %c0_39 = arith.constant 0 : index
        %63 = vector.load %arg18[%c0_38, %c0_39] : memref<4x128xf32, #tpu.memory_space<vmem>>, vector<4x128xf32>
        tpu.vector_store %arg18[%c0_38, %c0_39], %62 {strides = array<i32>} : memref<4x128xf32, #tpu.memory_space<vmem>>, vector<4x128xf32>,
      } else {
      }
    } else {
    }
    %c1_i32_17 = arith.constant 1 : i32
    %34 = arith.cmpi eq, %arg1, %c1_i32_17 : i32
    %35 = arith.andi %0, %34 : i1
    %36 = arith.extui %35 : i1 to i32
    %c0_i32_18 = arith.constant 0 : i32
    %37 = arith.cmpi ne, %36, %c0_i32_18 : i32
    scf.if %37 {
      %c0 = arith.constant 0 : index
      %c0_19 = arith.constant 0 : index
      %38 = vector.load %arg18[%c0, %c0_19] : memref<4x128xf32, #tpu.memory_space<vmem>>, vector<4x128xf32>
      %c0_20 = arith.constant 0 : index
      %c0_21 = arith.constant 0 : index
      %39 = vector.load %arg9[%c0_20, %c0_21] : memref<128x64xf32, #tpu.memory_space<vmem>>, vector<128x64xf32>
      %cst = arith.constant dense<0.000000e+00> : vector<4x64xf32>
      %40 = tpu.matmul %38, %39, %cst {dimension_numbers = #tpu.dot_dimension_numbers<[1], [0], [0], [1], [0, 0, 1, 1], [], []>} : vector<4x128xf32>, vector<128x64xf32>, vector<4x64xf32> -> vector<4x64xf32>
      %c0_22 = arith.constant 0 : index
      %c0_23 = arith.constant 0 : index
      %41 = vector.load %arg10[%c0_22, %c0_23] : memref<1x64xf32, #tpu.memory_space<vmem>>, vector<1x64xf32>
      %42 = vector.broadcast %41 : vector<1x64xf32> to vector<4x64xf32>
      %43 = arith.addf %40, %42 : vector<4x64xf32>
      %cst_24 = arith.constant 0.000000e+00 : f32
      %44 = vector.broadcast %cst_24 : f32 to vector<4x64xf32>
      %45 = arith.maximumf %43, %44 : vector<4x64xf32>
      %c0_25 = arith.constant 0 : index
      %c0_26 = arith.constant 0 : index
      %46 = vector.load %arg11[%c0_25, %c0_26] : memref<64x32xf32, #tpu.memory_space<vmem>>, vector<64x32xf32>
      %cst_27 = arith.constant dense<0.000000e+00> : vector<4x32xf32>
      %47 = tpu.matmul %45, %46, %cst_27 {dimension_numbers = #tpu.dot_dimension_numbers<[1], [0], [0], [1], [0, 0, 1, 1], [], []>} : vector<4x64xf32>, vector<64x32xf32>, vector<4x32xf32> -> vector<4x32xf32>
      %c0_28 = arith.constant 0 : index
      %c0_29 = arith.constant 0 : index
      %48 = vector.load %arg12[%c0_28, %c0_29] : memref<1x32xf32, #tpu.memory_space<vmem>>, vector<1x32xf32>
      %49 = vector.broadcast %48 : vector<1x32xf32> to vector<4x32xf32>
      %50 = arith.addf %47, %49 : vector<4x32xf32>
      %cst_30 = arith.constant 0.000000e+00 : f32
      %51 = vector.broadcast %cst_30 : f32 to vector<4x32xf32>
      %52 = arith.maximumf %50, %51 : vector<4x32xf32>
      %c0_31 = arith.constant 0 : index
      %c0_32 = arith.constant 0 : index
      %53 = vector.load %arg13[%c0_31, %c0_32] : memref<32x8xf32, #tpu.memory_space<vmem>>, vector<32x8xf32>
      %cst_33 = arith.constant dense<0.000000e+00> : vector<4x8xf32>
      %54 = tpu.matmul %52, %53, %cst_33 {dimension_numbers = #tpu.dot_dimension_numbers<[1], [0], [0], [1], [0, 0, 1, 1], [], []>} : vector<4x32xf32>, vector<32x8xf32>, vector<4x8xf32> -> vector<4x8xf32>
      %c0_34 = arith.constant 0 : index
      %c0_35 = arith.constant 0 : index
      %55 = vector.load %arg14[%c0_34, %c0_35] : memref<1x8xf32, #tpu.memory_space<vmem>>, vector<1x8xf32>
      %56 = vector.broadcast %55 : vector<1x8xf32> to vector<4x8xf32>
      %57 = arith.addf %54, %56 : vector<4x8xf32>
      %c0_36 = arith.constant 0 : index
      %c0_37 = arith.constant 0 : index
      %58 = vector.load %arg15[%c0_36, %c0_37] : memref<4x8xf32, #tpu.memory_space<vmem>>, vector<4x8xf32>
      tpu.vector_store %arg15[%c0_36, %c0_37], %57 {strides = array<i32>} : memref<4x8xf32, #tpu.memory_space<vmem>>, vector<4x8xf32>,
    } else {
    }
    return
  }
  func.func @transform_0(%arg0: i32, %arg1: i32) -> (i32, i32) {
    %c0_i32 = arith.constant 0 : i32
    %c0_i32_0 = arith.constant 0 : i32
    return %arg1, %c0_i32 : i32, i32
  }
  func.func @transform_1(%arg0: i32, %arg1: i32) -> (i32, i32) {
    %c0_i32 = arith.constant 0 : i32
    %c0_i32_0 = arith.constant 0 : i32
    return %c0_i32, %arg1 : i32, i32
  }
  func.func @transform_2(%arg0: i32, %arg1: i32) -> (i32, i32) {
    %c0_i32 = arith.constant 0 : i32
    %c0_i32_0 = arith.constant 0 : i32
    %c0_i32_1 = arith.constant 0 : i32
    return %c0_i32, %c0_i32_0 : i32, i32
  }
  func.func @transform_3(%arg0: i32, %arg1: i32) -> (i32, i32) {
    %c0_i32 = arith.constant 0 : i32
    %c0_i32_0 = arith.constant 0 : i32
    %c0_i32_1 = arith.constant 0 : i32
    return %c0_i32, %c0_i32_0 : i32, i32
  }
  func.func @transform_4(%arg0: i32, %arg1: i32) -> (i32, i32) {
    %c0_i32 = arith.constant 0 : i32
    %c0_i32_0 = arith.constant 0 : i32
    %c0_i32_1 = arith.constant 0 : i32
    return %c0_i32, %c0_i32_0 : i32, i32
  }
  func.func @transform_5(%arg0: i32, %arg1: i32) -> (i32, i32, i32) {
    %c0_i32 = arith.constant 0 : i32
    %c0_i32_0 = arith.constant 0 : i32
    %c0_i32_1 = arith.constant 0 : i32
    return %arg0, %c0_i32, %c0_i32_0 : i32, i32, i32
  }
  func.func @transform_6(%arg0: i32, %arg1: i32) -> (i32, i32, i32) {
    %c0_i32 = arith.constant 0 : i32
    %c0_i32_0 = arith.constant 0 : i32
    %c0_i32_1 = arith.constant 0 : i32
    return %arg0, %c0_i32, %c0_i32_0 : i32, i32, i32
  }
  func.func @transform_7(%arg0: i32, %arg1: i32) -> (i32, i32) {
    %c0_i32 = arith.constant 0 : i32
    %c0_i32_0 = arith.constant 0 : i32
    %c0_i32_1 = arith.constant 0 : i32
    return %c0_i32, %c0_i32_0 : i32, i32
  }
  func.func @transform_8(%arg0: i32, %arg1: i32) -> (i32, i32) {
    %c0_i32 = arith.constant 0 : i32
    %c0_i32_0 = arith.constant 0 : i32
    %c0_i32_1 = arith.constant 0 : i32
    return %c0_i32, %c0_i32_0 : i32, i32
  }
  func.func @transform_9(%arg0: i32, %arg1: i32) -> (i32, i32) {
    %c0_i32 = arith.constant 0 : i32
    %c0_i32_0 = arith.constant 0 : i32
    %c0_i32_1 = arith.constant 0 : i32
    return %c0_i32, %c0_i32_0 : i32, i32
  }
  func.func @transform_10(%arg0: i32, %arg1: i32) -> (i32, i32) {
    %c0_i32 = arith.constant 0 : i32
    %c0_i32_0 = arith.constant 0 : i32
    %c0_i32_1 = arith.constant 0 : i32
    return %c0_i32, %c0_i32_0 : i32, i32
  }
  func.func @transform_11(%arg0: i32, %arg1: i32) -> (i32, i32) {
    %c0_i32 = arith.constant 0 : i32
    %c0_i32_0 = arith.constant 0 : i32
    %c0_i32_1 = arith.constant 0 : i32
    return %c0_i32, %c0_i32_0 : i32, i32
  }
  func.func @transform_12(%arg0: i32, %arg1: i32) -> (i32, i32) {
    %c0_i32 = arith.constant 0 : i32
    %c0_i32_0 = arith.constant 0 : i32
    %c0_i32_1 = arith.constant 0 : i32
    return %c0_i32, %c0_i32_0 : i32, i32
  }
  func.func @transform_13(%arg0: i32, %arg1: i32) -> (i32, i32) {
    %c0_i32 = arith.constant 0 : i32
    %c0_i32_0 = arith.constant 0 : i32
    %c0_i32_1 = arith.constant 0 : i32
    return %c0_i32, %c0_i32_0 : i32, i32
  }
}

</mosaic_0001>

<llo_original>
// kernel: tpu_custom_call.1
$region0: #{tpu_custom_call.1}
  #allocation0 [shape = 'u32[]', space=smem, size = 0x4, offset = 0x4, fixed_abs, tag = 'smem constant byte address 0x4 - core index']
  #allocation1 [shape = 'u32[144,128]{1,0:T(1,128)}', space=vmem, size = 0x12000, scoped, tag = 'internal scratch']
  #allocation2 [shape = 'f32[256,128]{1,0:T(8,128)}', space=vmem, size = 0x20000, scoped, tag = 'scratch operand']
  #allocation3 [shape = 'f32[256,128]{1,0:T(8,128)}', space=vmem, size = 0x20000, scoped, tag = 'scratch operand']
  #allocation4 [shape = 'f32[4,128]{1,0:T(4,128)}', space=vmem, size = 0x800, scoped, tag = 'scratch operand']
  %s0 = inlined_call_operand.vmem [shape: bf16[256,256], index: 0, kind: input, shape index: {}]
  %s1 = inlined_call_operand.hbm [shape: f32[4,256], index: 1, kind: input, shape index: {}]
  %s2 = inlined_call_operand.vmem [shape: bf16[256,16], index: 2, kind: input, shape index: {}]
  %s3 = inlined_call_operand.hbm [shape: bf16[16,128], index: 3, kind: input, shape index: {}]
  %s4 = inlined_call_operand.hbm [shape: f32[1,128], index: 4, kind: input, shape index: {}]
  %s5 = inlined_call_operand.vmem [shape: bf16[2,128,128], index: 5, kind: input, shape index: {}]
  %s6 = inlined_call_operand.vmem [shape: f32[2,1,128], index: 6, kind: input, shape index: {}]
  %s7 = inlined_call_operand.vmem [shape: f32[128,64], index: 7, kind: input, shape index: {}]
  %s8 = inlined_call_operand.hbm [shape: f32[1,64], index: 8, kind: input, shape index: {}]
  %s9 = inlined_call_operand.vmem [shape: f32[64,32], index: 9, kind: input, shape index: {}]
  %s10 = inlined_call_operand.hbm [shape: f32[1,32], index: 10, kind: input, shape index: {}]
  %s11 = inlined_call_operand.vmem [shape: f32[32,8], index: 11, kind: input, shape index: {}]
  %s12 = inlined_call_operand.vmem [shape: f32[1,8], index: 12, kind: input, shape index: {}]
  %s13 = inlined_call_operand.hbm [shape: f32[4,8], index: 13, kind: output, shape index: {}]
  %s14 = sld [smem:[#allocation0]]
  $region129: #{tpu_custom_call.1} parent=0
    _
  %s16 = ssub.s32 1, %s14
  %s17 = scalar_select 0, %s16, %s14
  $region1: #{tpu_custom_call.1} parent=0
    #allocation5 [shape = 'u8[4096]{0}', space=vmem, size = 0x1000, scoped, tag = 'input window, operand 1']
    #allocation6 [shape = 's32[2]{0}', space=sflag, size = 0x8, scoped, tag = 'scoped memory for tpu_custom_call.1']
    #allocation7 [shape = 's32[2]{0}', space=sflag, size = 0x8, scoped, tag = 'scoped memory for tpu_custom_call.1']
    #allocation8 [shape = 'u8[4096]{0}', space=vmem, size = 0x1000, scoped, tag = 'input window, operand 3, single buffered']
    #allocation9 [shape = 's32[1]{0}', space=sflag, size = 0x4, scoped, tag = 'scoped memory for tpu_custom_call.1']
    #allocation10 [shape = 'u8[512]{0}', space=vmem, size = 0x400, scoped, tag = 'input window, operand 4, single buffered']
    #allocation11 [shape = 'u8[512]{0}', space=vmem, size = 0x400, scoped, tag = 'input window, operand 8, single buffered']
    #allocation12 [shape = 's32[1]{0}', space=sflag, size = 0x4, scoped, tag = 'scoped memory for tpu_custom_call.1']
    #allocation13 [shape = 'u8[512]{0}', space=vmem, size = 0x400, scoped, tag = 'input window, operand 10, single buffered']
    #allocation14 [shape = 'u8[2048]{0}', space=vmem, size = 0x800, scoped, tag = 'output window, operand 0, single buffered']
    %18 = vsyncpa [#allocation6], 0
    %s19 = scalar_lea.sflag [#allocation6], 1
    %20 = vsyncpa %s19, 0
    %21 = vsyncpa [#allocation9], 0
    %22 = vsyncpa [#allocation12], 0
    %23 = vsyncpa [#allocation7], 0
    loop: start=0, step=1, limit=6
    $region2: #{tpu_custom_call.1} parent=1 // loop_pre_header
      _
    $region3: #{tpu_custom_call.1} parent=1 // loop_header
      %s25 = sphi 0, %s29
      %p26 = scmp.ge.s32.totalorder %s25, 6
      %s32 = sphi 0, %s44
      %s33 = sphi 0, %s40
      %s34 = sphi 0, %s32
      %s35 = sphi 0, %s33
      %s36 = sphi 0, %s34
      %s37 = sphi 0, %s35
      %s47 = sphi 0, %s49
      %s50 = sphi 0, %s47
      %s51 = sphi 0, %s50
      %s67 = sphi 0, %s51
      %s73 = sphi 0, %s75
      %s76 = sphi 0, %s73
      %s77 = sphi 0, %s76
      %s93 = sphi 0, %s77
      %s97 = sphi 0, %s97
      %s99 = sphi 0, %s97
      %s100 = sphi 0, %s99
      %s114 = sphi 0, %s100
      %s118 = sphi 0, %s118
      %s120 = sphi 0, %s118
      %s121 = sphi 0, %s120
      %s135 = sphi 0, %s121
      %s139 = sphi 0, %s139
      %s141 = sphi 0, %s139
      %s142 = sphi 0, %s141
      %s156 = sphi 0, %s142
      %s162 = sphi 0, %s164
      %s165 = sphi 0, %s162
      %s166 = sphi 0, %s165
      %s182 = sphi 0, %s166
      %s188 = sphi 0, %s190
      %s191 = sphi 0, %s188
      %s192 = sphi 0, %s191
      %s208 = sphi 0, %s192
      %s212 = sphi 0, %s212
      %s214 = sphi 0, %s212
      %s215 = sphi 0, %s214
      %s229 = sphi 0, %s215
      %s233 = sphi 0, %s233
      %s235 = sphi 0, %s233
      %s236 = sphi 0, %s235
      %s250 = sphi 0, %s236
      %s254 = sphi 0, %s254
      %s256 = sphi 0, %s254
      %s257 = sphi 0, %s256
      %s271 = sphi 0, %s257
      %s275 = sphi 0, %s275
      %s277 = sphi 0, %s275
      %s278 = sphi 0, %s277
      %s292 = sphi 0, %s278
      %s296 = sphi 0, %s296
      %s298 = sphi 0, %s296
      %s299 = sphi 0, %s298
      %s313 = sphi 0, %s299
      %s317 = sphi 0, %s317
      %s319 = sphi 0, %s317
      %s320 = sphi 0, %s319
      %s334 = sphi 0, %s320
      %s338 = sphi 0, %s338
      %s340 = sphi 0, %s338
      %s341 = sphi 0, %s340
      %s355 = sphi 0, %s341
    $region4: #{tpu_custom_call.1} parent=1 // loop_header_branch
      %28 = sbr.rel (%p26) target = $region8
    $region5: #{tpu_custom_call.1} parent=1 // loop_body
      %s30 = ssub.s32 %s25, 1
      %s31 = ssub.s32 %s25, 2
      %s38 = sadd.s32 1, %s33
      %p39 = scmp.ge.s32.totalorder %s38, 2
      %s40 = scalar_select %p39, 0, %s38
      %s41 = sadd.s32 1, %s32
      %s42 = scalar_select %p39, %s41, %s32
      %p43 = scmp.ge.s32.totalorder %s42, 2
      %s44 = scalar_select %p43, 0, %s42
      %s45 = ssub.s32 %s33, %s40
      %p46 = scmp.eq.s32.totalorder %s45, 0
      %s48 = sadd.s32 %s47, 1
      %s49 = scalar_select %p46, %s47, %s48
      %p52 = pneg %p46
      %p53 = scmp.eq.s32.totalorder %s25, 3
      %p54 = por %p52, %p53
      %p55 = scmp.ne.s32.totalorder %s47, %s50
      %p56 = scmp.eq.s32.totalorder %s25, 0
      %p57 = por %p55, %p56
      %p58 = scmp.ne.s32.totalorder %s47, %s50
      %p59 = scmp.eq.s32.totalorder %s30, 3
      %p60 = por %p58, %p59
      %p61 = scmp.ne.s32.totalorder %s50, %s51
      %p62 = scmp.eq.s32.totalorder %s30, 0
      %p63 = por %p61, %p62
      %p64 = scmp.ne.s32.totalorder %s50, %s51
      %p65 = scmp.eq.s32.totalorder %s31, 3
      %p66 = por %p64, %p65
      %p68 = scmp.ne.s32.totalorder %s51, %s67
      %p69 = scmp.eq.s32.totalorder %s31, 0
      %p70 = por %p68, %p69
      %s71 = ssub.s32 %s33, %s40
      %p72 = scmp.eq.s32.totalorder %s71, 0
      %s74 = sadd.s32 %s73, 1
      %s75 = scalar_select %p72, %s73, %s74
      %p78 = pneg %p72
      %p79 = scmp.eq.s32.totalorder %s25, 3
      %p80 = por %p78, %p79
      %p81 = scmp.ne.s32.totalorder %s73, %s76
      %p82 = scmp.eq.s32.totalorder %s25, 0
      %p83 = por %p81, %p82
      %p84 = scmp.ne.s32.totalorder %s73, %s76
      %p85 = scmp.eq.s32.totalorder %s30, 3
      %p86 = por %p84, %p85
      %p87 = scmp.ne.s32.totalorder %s76, %s77
      %p88 = scmp.eq.s32.totalorder %s30, 0
      %p89 = por %p87, %p88
      %p90 = scmp.ne.s32.totalorder %s76, %s77
      %p91 = scmp.eq.s32.totalorder %s31, 3
      %p92 = por %p90, %p91
      %p94 = scmp.ne.s32.totalorder %s77, %s93
      %p95 = scmp.eq.s32.totalorder %s31, 0
      %p96 = por %p94, %p95
      %s98 = sadd.s32 %s97, 1
      %p101 = scmp.eq.s32.totalorder %s25, 3
      %p102 = scmp.ne.s32.totalorder %s97, %s99
      %p103 = scmp.eq.s32.totalorder %s25, 0
      %p104 = por %p102, %p103
      %p105 = scmp.ne.s32.totalorder %s97, %s99
      %p106 = scmp.eq.s32.totalorder %s30, 3
      %p107 = por %p105, %p106
      %p108 = scmp.ne.s32.totalorder %s99, %s100
      %p109 = scmp.eq.s32.totalorder %s30, 0
      %p110 = por %p108, %p109
      %p111 = scmp.ne.s32.totalorder %s99, %s100
      %p112 = scmp.eq.s32.totalorder %s31, 3
      %p113 = por %p111, %p112
      %p115 = scmp.ne.s32.totalorder %s100, %s114
      %p116 = scmp.eq.s32.totalorder %s31, 0
      %p117 = por %p115, %p116
      %s119 = sadd.s32 %s118, 1
      %p122 = scmp.eq.s32.totalorder %s25, 3
      %p123 = scmp.ne.s32.totalorder %s118, %s120
      %p124 = scmp.eq.s32.totalorder %s25, 0
      %p125 = por %p123, %p124
      %p126 = scmp.ne.s32.totalorder %s118, %s120
      %p127 = scmp.eq.s32.totalorder %s30, 3
      %p128 = por %p126, %p127
      %p129 = scmp.ne.s32.totalorder %s120, %s121
      %p130 = scmp.eq.s32.totalorder %s30, 0
      %p131 = por %p129, %p130
      %p132 = scmp.ne.s32.totalorder %s120, %s121
      %p133 = scmp.eq.s32.totalorder %s31, 3
      %p134 = por %p132, %p133
      %p136 = scmp.ne.s32.totalorder %s121, %s135
      %p137 = scmp.eq.s32.totalorder %s31, 0
      %p138 = por %p136, %p137
      %s140 = sadd.s32 %s139, 1
      %p143 = scmp.eq.s32.totalorder %s25, 3
      %p144 = scmp.ne.s32.totalorder %s139, %s141
      %p145 = scmp.eq.s32.totalorder %s25, 0
      %p146 = por %p144, %p145
      %p147 = scmp.ne.s32.totalorder %s139, %s141
      %p148 = scmp.eq.s32.totalorder %s30, 3
      %p149 = por %p147, %p148
      %p150 = scmp.ne.s32.totalorder %s141, %s142
      %p151 = scmp.eq.s32.totalorder %s30, 0
      %p152 = por %p150, %p151
      %p153 = scmp.ne.s32.totalorder %s141, %s142
      %p154 = scmp.eq.s32.totalorder %s31, 3
      %p155 = por %p153, %p154
      %p157 = scmp.ne.s32.totalorder %s142, %s156
      %p158 = scmp.eq.s32.totalorder %s31, 0
      %p159 = por %p157, %p158
      %s160 = ssub.s32 %s32, %s44
      %p161 = scmp.eq.s32.totalorder %s160, 0
      %s163 = sadd.s32 %s162, 1
      %s164 = scalar_select %p161, %s162, %s163
      %p167 = pneg %p161
      %p168 = scmp.eq.s32.totalorder %s25, 3
      %p169 = por %p167, %p168
      %p170 = scmp.ne.s32.totalorder %s162, %s165
      %p171 = scmp.eq.s32.totalorder %s25, 0
      %p172 = por %p170, %p171
      %p173 = scmp.ne.s32.totalorder %s162, %s165
      %p174 = scmp.eq.s32.totalorder %s30, 3
      %p175 = por %p173, %p174
      %p176 = scmp.ne.s32.totalorder %s165, %s166
      %p177 = scmp.eq.s32.totalorder %s30, 0
      %p178 = por %p176, %p177
      %p179 = scmp.ne.s32.totalorder %s165, %s166
      %p180 = scmp.eq.s32.totalorder %s31, 3
      %p181 = por %p179, %p180
      %p183 = scmp.ne.s32.totalorder %s166, %s182
      %p184 = scmp.eq.s32.totalorder %s31, 0
      %p185 = por %p183, %p184
      %s186 = ssub.s32 %s32, %s44
      %p187 = scmp.eq.s32.totalorder %s186, 0
      %s189 = sadd.s32 %s188, 1
      %s190 = scalar_select %p187, %s188, %s189
      %p193 = pneg %p187
      %p194 = scmp.eq.s32.totalorder %s25, 3
      %p195 = por %p193, %p194
      %p196 = scmp.ne.s32.totalorder %s188, %s191
      %p197 = scmp.eq.s32.totalorder %s25, 0
      %p198 = por %p196, %p197
      %p199 = scmp.ne.s32.totalorder %s188, %s191
      %p200 = scmp.eq.s32.totalorder %s30, 3
      %p201 = por %p199, %p200
      %p202 = scmp.ne.s32.totalorder %s191, %s192
      %p203 = scmp.eq.s32.totalorder %s30, 0
      %p204 = por %p202, %p203
      %p205 = scmp.ne.s32.totalorder %s191, %s192
      %p206 = scmp.eq.s32.totalorder %s31, 3
      %p207 = por %p205, %p206
      %p209 = scmp.ne.s32.totalorder %s192, %s208
      %p210 = scmp.eq.s32.totalorder %s31, 0
      %p211 = por %p209, %p210
      %s213 = sadd.s32 %s212, 1
      %p216 = scmp.eq.s32.totalorder %s25, 3
      %p217 = scmp.ne.s32.totalorder %s212, %s214
      %p218 = scmp.eq.s32.totalorder %s25, 0
      %p219 = por %p217, %p218
      %p220 = scmp.ne.s32.totalorder %s212, %s214
      %p221 = scmp.eq.s32.totalorder %s30, 3
      %p222 = por %p220, %p221
      %p223 = scmp.ne.s32.totalorder %s214, %s215
      %p224 = scmp.eq.s32.totalorder %s30, 0
      %p225 = por %p223, %p224
      %p226 = scmp.ne.s32.totalorder %s214, %s215
      %p227 = scmp.eq.s32.totalorder %s31, 3
      %p228 = por %p226, %p227
      %p230 = scmp.ne.s32.totalorder %s215, %s229
      %p231 = scmp.eq.s32.totalorder %s31, 0
      %p232 = por %p230, %p231
      %s234 = sadd.s32 %s233, 1
      %p237 = scmp.eq.s32.totalorder %s25, 3
      %p238 = scmp.ne.s32.totalorder %s233, %s235
      %p239 = scmp.eq.s32.totalorder %s25, 0
      %p240 = por %p238, %p239
      %p241 = scmp.ne.s32.totalorder %s233, %s235
      %p242 = scmp.eq.s32.totalorder %s30, 3
      %p243 = por %p241, %p242
      %p244 = scmp.ne.s32.totalorder %s235, %s236
      %p245 = scmp.eq.s32.totalorder %s30, 0
      %p246 = por %p244, %p245
      %p247 = scmp.ne.s32.totalorder %s235, %s236
      %p248 = scmp.eq.s32.totalorder %s31, 3
      %p249 = por %p247, %p248
      %p251 = scmp.ne.s32.totalorder %s236, %s250
      %p252 = scmp.eq.s32.totalorder %s31, 0
      %p253 = por %p251, %p252
      %s255 = sadd.s32 %s254, 1
      %p258 = scmp.eq.s32.totalorder %s25, 3
      %p259 = scmp.ne.s32.totalorder %s254, %s256
      %p260 = scmp.eq.s32.totalorder %s25, 0
      %p261 = por %p259, %p260
      %p262 = scmp.ne.s32.totalorder %s254, %s256
      %p263 = scmp.eq.s32.totalorder %s30, 3
      %p264 = por %p262, %p263
      %p265 = scmp.ne.s32.totalorder %s256, %s257
      %p266 = scmp.eq.s32.totalorder %s30, 0
      %p267 = por %p265, %p266
      %p268 = scmp.ne.s32.totalorder %s256, %s257
      %p269 = scmp.eq.s32.totalorder %s31, 3
      %p270 = por %p268, %p269
      %p272 = scmp.ne.s32.totalorder %s257, %s271
      %p273 = scmp.eq.s32.totalorder %s31, 0
      %p274 = por %p272, %p273
      %s276 = sadd.s32 %s275, 1
      %p279 = scmp.eq.s32.totalorder %s25, 3
      %p280 = scmp.ne.s32.totalorder %s275, %s277
      %p281 = scmp.eq.s32.totalorder %s25, 0
      %p282 = por %p280, %p281
      %p283 = scmp.ne.s32.totalorder %s275, %s277
      %p284 = scmp.eq.s32.totalorder %s30, 3
      %p285 = por %p283, %p284
      %p286 = scmp.ne.s32.totalorder %s277, %s278
      %p287 = scmp.eq.s32.totalorder %s30, 0
      %p288 = por %p286, %p287
      %p289 = scmp.ne.s32.totalorder %s277, %s278
      %p290 = scmp.eq.s32.totalorder %s31, 3
      %p291 = por %p289, %p290
      %p293 = scmp.ne.s32.totalorder %s278, %s292
      %p294 = scmp.eq.s32.totalorder %s31, 0
      %p295 = por %p293, %p294
      %s297 = sadd.s32 %s296, 1
      %p300 = scmp.eq.s32.totalorder %s25, 3
      %p301 = scmp.ne.s32.totalorder %s296, %s298
      %p302 = scmp.eq.s32.totalorder %s25, 0
      %p303 = por %p301, %p302
      %p304 = scmp.ne.s32.totalorder %s296, %s298
      %p305 = scmp.eq.s32.totalorder %s30, 3
      %p306 = por %p304, %p305
      %p307 = scmp.ne.s32.totalorder %s298, %s299
      %p308 = scmp.eq.s32.totalorder %s30, 0
      %p309 = por %p307, %p308
      %p310 = scmp.ne.s32.totalorder %s298, %s299
      %p311 = scmp.eq.s32.totalorder %s31, 3
      %p312 = por %p310, %p311
      %p314 = scmp.ne.s32.totalorder %s299, %s313
      %p315 = scmp.eq.s32.totalorder %s31, 0
      %p316 = por %p314, %p315
      %s318 = sadd.s32 %s317, 1
      %p321 = scmp.eq.s32.totalorder %s25, 3
      %p322 = scmp.ne.s32.totalorder %s317, %s319
      %p323 = scmp.eq.s32.totalorder %s25, 0
      %p324 = por %p322, %p323
      %p325 = scmp.ne.s32.totalorder %s317, %s319
      %p326 = scmp.eq.s32.totalorder %s30, 3
      %p327 = por %p325, %p326
      %p328 = scmp.ne.s32.totalorder %s319, %s320
      %p329 = scmp.eq.s32.totalorder %s30, 0
      %p330 = por %p328, %p329
      %p331 = scmp.ne.s32.totalorder %s319, %s320
      %p332 = scmp.eq.s32.totalorder %s31, 3
      %p333 = por %p331, %p332
      %p335 = scmp.ne.s32.totalorder %s320, %s334
      %p336 = scmp.eq.s32.totalorder %s31, 0
      %p337 = por %p335, %p336
      %s339 = sadd.s32 %s338, 1
      %p342 = scmp.eq.s32.totalorder %s25, 3
      %p343 = scmp.ne.s32.totalorder %s338, %s340
      %p344 = scmp.eq.s32.totalorder %s25, 0
      %p345 = por %p343, %p344
      %p346 = scmp.ne.s32.totalorder %s338, %s340
      %p347 = scmp.eq.s32.totalorder %s30, 3
      %p348 = por %p346, %p347
      %p349 = scmp.ne.s32.totalorder %s340, %s341
      %p350 = scmp.eq.s32.totalorder %s30, 0
      %p351 = por %p349, %p350
      %p352 = scmp.ne.s32.totalorder %s340, %s341
      %p353 = scmp.eq.s32.totalorder %s31, 3
      %p354 = por %p352, %p353
      %p356 = scmp.ne.s32.totalorder %s341, %s355
      %p357 = scmp.eq.s32.totalorder %s31, 0
      %p358 = por %p356, %p357
      %p359 = scmp.le.s32.totalorder 1, %s25
      %p360 = scmp.lt.s32.totalorder %s25, 5
      %p361 = pnand %p359, %p360
      %p362 = pneg %p361
      // Predicated region
      $region9: #{tpu_custom_call.1} parent=5 // pred_check
        _
      $region10: #{tpu_custom_call.1} parent=5 // pred_check_branch
        %364 = sbr.rel (%p361) target = $region12
      $region11: #{tpu_custom_call.1} parent=5 // pred_region
        %s365 = ssub.s32 %s25, 1
        // Predicated region
        $region13: #{tpu_custom_call.1} parent=11 // pred_check
          %p366 = pneg %p110
        $region14: #{tpu_custom_call.1} parent=11 // pred_check_branch
          %368 = sbr.rel (%p366) target = $region16
        $region15: #{tpu_custom_call.1} parent=11 // pred_region
          _
        $region16: #{tpu_custom_call.1} parent=11 // pred_fallthru
          _
        // Predicated region
        $region17: #{tpu_custom_call.1} parent=11 // pred_check
          %p369 = pneg %p131
        $region18: #{tpu_custom_call.1} parent=11 // pred_check_branch
          %371 = sbr.rel (%p369) target = $region20
        $region19: #{tpu_custom_call.1} parent=11 // pred_region
          %s373 = ssub.s32 128, 128
          %374 = vsyncadd [#allocation9], %s373
          %s375 = sshll.u32 [#allocation8], 4
          %s376 = int_to_ptr.vmem [resolvable:$true] %s375
          %381 = dma.hbm_to_vmem [thread:$0]  %s3, 128, %s376, [#allocation9], 64, 64, 4
        $region20: #{tpu_custom_call.1} parent=11 // pred_fallthru
          _
        // Predicated region
        $region21: #{tpu_custom_call.1} parent=11 // pred_check
          %p382 = pneg %p152
        $region22: #{tpu_custom_call.1} parent=11 // pred_check_branch
          %384 = sbr.rel (%p382) target = $region24
        $region23: #{tpu_custom_call.1} parent=11 // pred_region
          %s386 = ssub.s32 16, 16
          %387 = vsyncadd [#allocation9], %s386
          %s389 = sshll.u32 [#allocation10], 4
          %s390 = int_to_ptr.vmem [resolvable:$true] %s389
          %392 = dma.hbm_to_vmem [thread:$0]  %s4, 16, %s390, [#allocation9]
        $region24: #{tpu_custom_call.1} parent=11 // pred_fallthru
          _
        // Predicated region
        $region25: #{tpu_custom_call.1} parent=11 // pred_check
          %p393 = pneg %p225
        $region26: #{tpu_custom_call.1} parent=11 // pred_check_branch
          %395 = sbr.rel (%p393) target = $region28
        $region27: #{tpu_custom_call.1} parent=11 // pred_region
          _
        $region28: #{tpu_custom_call.1} parent=11 // pred_fallthru
          _
        // Predicated region
        $region29: #{tpu_custom_call.1} parent=11 // pred_check
          %p396 = pneg %p246
        $region30: #{tpu_custom_call.1} parent=11 // pred_check_branch
          %398 = sbr.rel (%p396) target = $region32
        $region31: #{tpu_custom_call.1} parent=11 // pred_region
          %s400 = ssub.s32 16, 16
          %401 = vsyncadd [#allocation12], %s400
          %s403 = sshll.u32 [#allocation11], 4
          %s404 = int_to_ptr.vmem [resolvable:$true] %s403
          %406 = dma.hbm_to_vmem [thread:$0]  %s8, 16, %s404, [#allocation12]
        $region32: #{tpu_custom_call.1} parent=11 // pred_fallthru
          _
        // Predicated region
        $region33: #{tpu_custom_call.1} parent=11 // pred_check
          %p407 = pneg %p267
        $region34: #{tpu_custom_call.1} parent=11 // pred_check_branch
          %409 = sbr.rel (%p407) target = $region36
        $region35: #{tpu_custom_call.1} parent=11 // pred_region
          _
        $region36: #{tpu_custom_call.1} parent=11 // pred_fallthru
          _
        // Predicated region
        $region37: #{tpu_custom_call.1} parent=11 // pred_check
          %p410 = pneg %p288
        $region38: #{tpu_custom_call.1} parent=11 // pred_check_branch
          %412 = sbr.rel (%p410) target = $region40
        $region39: #{tpu_custom_call.1} parent=11 // pred_region
          %s414 = ssub.s32 16, 16
          %415 = vsyncadd [#allocation12], %s414
          %s417 = sshll.u32 [#allocation13], 4
          %s418 = int_to_ptr.vmem [resolvable:$true] %s417
          %420 = dma.hbm_to_vmem [thread:$0]  %s10, 16, %s418, [#allocation12]
        $region40: #{tpu_custom_call.1} parent=11 // pred_fallthru
          _
        // Predicated region
        $region41: #{tpu_custom_call.1} parent=11 // pred_check
          %p421 = pneg %p309
        $region42: #{tpu_custom_call.1} parent=11 // pred_check_branch
          %423 = sbr.rel (%p421) target = $region44
        $region43: #{tpu_custom_call.1} parent=11 // pred_region
          _
        $region44: #{tpu_custom_call.1} parent=11 // pred_fallthru
          _
        // Predicated region
        $region45: #{tpu_custom_call.1} parent=11 // pred_check
          %p424 = pneg %p330
        $region46: #{tpu_custom_call.1} parent=11 // pred_check_branch
          %426 = sbr.rel (%p424) target = $region48
        $region47: #{tpu_custom_call.1} parent=11 // pred_region
          _
        $region48: #{tpu_custom_call.1} parent=11 // pred_fallthru
          _
      $region12: #{tpu_custom_call.1} parent=5 // pred_fallthru
        _
      %p427 = scmp.lt.s32.totalorder %s25, 4
      // Predicated region
      $region49: #{tpu_custom_call.1} parent=5 // pred_check
        %p428 = pneg %p427
      $region50: #{tpu_custom_call.1} parent=5 // pred_check_branch
        %430 = sbr.rel (%p428) target = $region52
      $region51: #{tpu_custom_call.1} parent=5 // pred_region
        // Predicated region
        $region53: #{tpu_custom_call.1} parent=51 // pred_check
          %p431 = pneg %p57
        $region54: #{tpu_custom_call.1} parent=51 // pred_check_branch
          %433 = sbr.rel (%p431) target = $region56
        $region55: #{tpu_custom_call.1} parent=51 // pred_region
          %s434 = smul.u32 16, %s33
          %p435 = scmp.lt.s32.totalorder %s434, 31
          %s436 = scalar_select %p435, %s434, 31
          %s437 = smul.addr %s436, 2
          %s438 = smul.addr %s437, 4
          %s439 = scalar_lea.vmem %s0, %s438
          %s440 = smul.u32 16, %s33
        $region56: #{tpu_custom_call.1} parent=51 // pred_fallthru
          _
        // Predicated region
        $region57: #{tpu_custom_call.1} parent=51 // pred_check
          %p441 = pneg %p83
        $region58: #{tpu_custom_call.1} parent=51 // pred_check_branch
          %443 = sbr.rel (%p441) target = $region60
        $region59: #{tpu_custom_call.1} parent=51 // pred_region
          %s444 = sand.u32 %s73, 1
          %s445 = scalar_lea.sflag [#allocation6], %s444
          %s446 = sand.u32 %s73, 1
          %s447 = smul.addr %s446, 4
          %s448 = scalar_lea.vmem [#allocation5], %s447
          %s450 = ssub.s32 64, 64
          %451 = vsyncadd %s445, %s450
          %s452 = smul.addr %s33, 64
          %s453 = scalar_lea.hbm %s1, %s452
          %s455 = sshll.u32 %s448, 4
          %s456 = int_to_ptr.vmem [resolvable:$true] %s455
          %458 = dma.hbm_to_vmem [thread:$0]  %s453, 64, %s456, %s445
        $region60: #{tpu_custom_call.1} parent=51 // pred_fallthru
          _
        // Predicated region
        $region61: #{tpu_custom_call.1} parent=51 // pred_check
          %p459 = pneg %p172
        $region62: #{tpu_custom_call.1} parent=51 // pred_check_branch
          %461 = sbr.rel (%p459) target = $region64
        $region63: #{tpu_custom_call.1} parent=51 // pred_region
          %p462 = scmp.lt.s32.totalorder %s32, 1
          %s463 = scalar_select %p462, %s32, 1
          %s464 = smul.addr %s463, 16
          %s465 = smul.addr %s464, 4
          %s466 = scalar_lea.vmem %s5, %s465
        $region64: #{tpu_custom_call.1} parent=51 // pred_fallthru
          _
        // Predicated region
        $region65: #{tpu_custom_call.1} parent=51 // pred_check
          %p467 = pneg %p198
        $region66: #{tpu_custom_call.1} parent=51 // pred_check_branch
          %469 = sbr.rel (%p467) target = $region68
        $region67: #{tpu_custom_call.1} parent=51 // pred_region
          %p470 = scmp.lt.s32.totalorder %s32, 1
          %s471 = scalar_select %p470, %s32, 1
          %s472 = scalar_lea.vmem %s6, %s471
        $region68: #{tpu_custom_call.1} parent=51 // pred_fallthru
          _
      $region52: #{tpu_custom_call.1} parent=5 // pred_fallthru
        _
      %p473 = scmp.le.s32.totalorder 1, %s25
      %p474 = scmp.lt.s32.totalorder %s25, 5
      %p475 = pnand %p473, %p474
      %p476 = pneg %p475
      // Predicated region
      $region69: #{tpu_custom_call.1} parent=5 // pred_check
        _
      $region70: #{tpu_custom_call.1} parent=5 // pred_check_branch
        %478 = sbr.rel (%p475) target = $region72
      $region71: #{tpu_custom_call.1} parent=5 // pred_region
        %s479 = ssub.s32 %s25, 1
        %s480 = sand.u32 %s76, 1
        %s481 = scalar_lea.sflag [#allocation6], %s480
        %s482 = sand.u32 %s76, 1
        %s483 = smul.addr %s482, 4
        %s484 = scalar_lea.vmem [#allocation5], %s483
        // Predicated region
        $region73: #{tpu_custom_call.1} parent=71 // pred_check
          %p485 = pneg %p89
        $region74: #{tpu_custom_call.1} parent=71 // pred_check_branch
          %487 = sbr.rel (%p485) target = $region76
        $region75: #{tpu_custom_call.1} parent=71 // pred_region
          %488 = dma.done %s481, 64
        $region76: #{tpu_custom_call.1} parent=71 // pred_fallthru
          _
        // Predicated region
        $region77: #{tpu_custom_call.1} parent=71 // pred_check
          %p489 = pneg %p131
        $region78: #{tpu_custom_call.1} parent=71 // pred_check_branch
          %491 = sbr.rel (%p489) target = $region80
        $region79: #{tpu_custom_call.1} parent=71 // pred_region
          %492 = dma.done [#allocation9], 128
        $region80: #{tpu_custom_call.1} parent=71 // pred_fallthru
          _
        // Predicated region
        $region81: #{tpu_custom_call.1} parent=71 // pred_check
          %p493 = pneg %p152
        $region82: #{tpu_custom_call.1} parent=71 // pred_check_branch
          %495 = sbr.rel (%p493) target = $region84
        $region83: #{tpu_custom_call.1} parent=71 // pred_region
          %496 = dma.done [#allocation9], 16
        $region84: #{tpu_custom_call.1} parent=71 // pred_fallthru
          _
        // Predicated region
        $region85: #{tpu_custom_call.1} parent=71 // pred_check
          %p497 = pneg %p246
        $region86: #{tpu_custom_call.1} parent=71 // pred_check_branch
          %499 = sbr.rel (%p497) target = $region88
        $region87: #{tpu_custom_call.1} parent=71 // pred_region
          %500 = dma.done [#allocation12], 16
        $region88: #{tpu_custom_call.1} parent=71 // pred_fallthru
          _
        // Predicated region
        $region89: #{tpu_custom_call.1} parent=71 // pred_check
          %p501 = pneg %p288
        $region90: #{tpu_custom_call.1} parent=71 // pred_check_branch
          %503 = sbr.rel (%p501) target = $region92
        $region91: #{tpu_custom_call.1} parent=71 // pred_region
          %504 = dma.done [#allocation12], 16
        $region92: #{tpu_custom_call.1} parent=71 // pred_fallthru
          _
        %s505 = smul.u32 16, %s35
        %p506 = scmp.lt.s32.totalorder %s505, 31
        %s507 = scalar_select %p506, %s505, 31
        %s508 = smul.addr %s507, 2
        %s509 = smul.addr %s508, 4
        %s510 = scalar_lea.vmem %s0, %s509
        %p511 = pneg %p63
        %p512 = pneg %p60
        %s513 = sand.u32 %s76, 1
        %s514 = scalar_lea.sflag [#allocation6], %s513
        %s515 = sand.u32 %s76, 1
        %s516 = smul.addr %s515, 4
        %s517 = scalar_lea.vmem [#allocation5], %s516
        %p518 = pneg %p89
        %p519 = pneg %p86
        %p520 = pneg %p110
        %p521 = pneg %p107
        %p522 = pneg %p131
        %p523 = pneg %p128
        %p524 = pneg %p152
        %p525 = pneg %p149
        %p526 = scmp.lt.s32.totalorder %s34, 1
        %s527 = scalar_select %p526, %s34, 1
        %s528 = smul.addr %s527, 16
        %s529 = smul.addr %s528, 4
        %s530 = scalar_lea.vmem %s5, %s529
        %p531 = pneg %p178
        %p532 = pneg %p175
        %p533 = scmp.lt.s32.totalorder %s34, 1
        %s534 = scalar_select %p533, %s34, 1
        %s535 = scalar_lea.vmem %s6, %s534
        %p536 = pneg %p204
        %p537 = pneg %p201
        %p538 = pneg %p225
        %p539 = pneg %p222
        %p540 = pneg %p246
        %p541 = pneg %p243
        %p542 = pneg %p267
        %p543 = pneg %p264
        %p544 = pneg %p288
        %p545 = pneg %p285
        %p546 = pneg %p309
        %p547 = pneg %p306
        %p548 = pneg %p330
        %p549 = pneg %p327
        %p550 = pneg %p351
        %p551 = pneg %p348
        %s552 = smul.u32 16, %s35
        %p553 = scmp.lt.s32.totalorder %s552, 31
        %s554 = scalar_select %p553, %s552, 31
        %s555 = smul.addr %s554, 2
        %s556 = smul.addr %s555, 4
        %s557 = scalar_lea.vmem %s0, %s556
        %s558 = smul.u32 16, %s35
        %p559 = scmp.lt.s32.totalorder %s34, 1
        %s560 = scalar_select %p559, %s34, 1
        %s561 = smul.addr %s560, 16
        %s562 = smul.addr %s561, 4
        %s563 = scalar_lea.vmem %s5, %s562
        %p564 = scmp.lt.s32.totalorder %s34, 1
        %s565 = scalar_select %p564, %s34, 1
        %s566 = scalar_lea.vmem %s6, %s565
        %p568 = scmp.eq.s32.totalorder %s34, 1
        %p569 = scmp.eq.s32.totalorder %s34, 0
        %p570 = scmp.eq.s32.totalorder %s35, 0
        %p571 = pnand %p569, %p570
        %p572 = pneg %p571
        // Predicated region
        $region93: #{tpu_custom_call.1} parent=71 // pred_check
          _
        $region94: #{tpu_custom_call.1} parent=71 // pred_check_branch
          %574 = sbr.rel (%p571) target = $region96
        $region95: #{tpu_custom_call.1} parent=71 // pred_region
          %v575 = vld [vmem:[%s2] sm:$0xf]
          %v576 = vld [vmem:[%s2 + $0x4] sm:$0xf]
          %v577 = vld [vmem:[%s2 + $0x8] sm:$0xf]
          %v578 = vld [vmem:[%s2 + $0xc] sm:$0xf]
          %v579 = vld [vmem:[%s2 + $0x10] sm:$0xf]
          %v580 = vld [vmem:[%s2 + $0x14] sm:$0xf]
          %v581 = vld [vmem:[%s2 + $0x18] sm:$0xf]
          %v582 = vld [vmem:[%s2 + $0x1c] sm:$0xf]
          %v583 = vld [vmem:[%s2 + $0x20] sm:$0xf]
          %v584 = vld [vmem:[%s2 + $0x24] sm:$0xf]
          %v585 = vld [vmem:[%s2 + $0x28] sm:$0xf]
          %v586 = vld [vmem:[%s2 + $0x2c] sm:$0xf]
          %v587 = vld [vmem:[%s2 + $0x30] sm:$0xf]
          %v588 = vld [vmem:[%s2 + $0x34] sm:$0xf]
          %v589 = vld [vmem:[%s2 + $0x38] sm:$0xf]
          %v590 = vld [vmem:[%s2 + $0x3c] sm:$0xf]
          %v591 = vld [vmem:[%s2 + $0x40] sm:$0xf]
          %v592 = vld [vmem:[%s2 + $0x44] sm:$0xf]
          %v593 = vld [vmem:[%s2 + $0x48] sm:$0xf]
          %v594 = vld [vmem:[%s2 + $0x4c] sm:$0xf]
          %v595 = vld [vmem:[%s2 + $0x50] sm:$0xf]
          %v596 = vld [vmem:[%s2 + $0x54] sm:$0xf]
          %v597 = vld [vmem:[%s2 + $0x58] sm:$0xf]
          %v598 = vld [vmem:[%s2 + $0x5c] sm:$0xf]
          %v599 = vld [vmem:[%s2 + $0x60] sm:$0xf]
          %v600 = vld [vmem:[%s2 + $0x64] sm:$0xf]
          %v601 = vld [vmem:[%s2 + $0x68] sm:$0xf]
          %v602 = vld [vmem:[%s2 + $0x6c] sm:$0xf]
          %v603 = vld [vmem:[%s2 + $0x70] sm:$0xf]
          %v604 = vld [vmem:[%s2 + $0x74] sm:$0xf]
          %v605 = vld [vmem:[%s2 + $0x78] sm:$0xf]
          %v606 = vld [vmem:[%s2 + $0x7c] sm:$0xf]
          %v607 = vld [vmem:[#allocation8] sm:$0xf]
          %v608 = vld [vmem:[#allocation8 + $0x4] sm:$0xf]
          %v609 = vld [vmem:[#allocation10] sm:$0x1]
          %v611 = vlaneseq
          %v612 = vshrl.u32 %v611, 7
          %v613 = vsub.s32 0, %v612
          %v614 = vrot.slane %v609, %v613
          %v648 = vunpack.c.l.b16 %v575
          %v649 = vunpack.c.l.b16 %v576
          %v650 = vunpack.c.l.b16 %v577
          %v651 = vunpack.c.l.b16 %v578
          %v652 = vunpack.c.l.b16 %v579
          %v653 = vunpack.c.l.b16 %v580
          %v654 = vunpack.c.l.b16 %v581
          %v655 = vunpack.c.l.b16 %v582
          %v656 = vunpack.c.l.b16 %v583
          %v657 = vunpack.c.l.b16 %v584
          %v658 = vunpack.c.l.b16 %v585
          %v659 = vunpack.c.l.b16 %v586
          %v660 = vunpack.c.l.b16 %v587
          %v661 = vunpack.c.l.b16 %v588
          %v662 = vunpack.c.l.b16 %v589
          %v663 = vunpack.c.l.b16 %v590
          %v664 = vunpack.c.l.b16 %v591
          %v665 = vunpack.c.l.b16 %v592
          %v666 = vunpack.c.l.b16 %v593
          %v667 = vunpack.c.l.b16 %v594
          %v668 = vunpack.c.l.b16 %v595
          %v669 = vunpack.c.l.b16 %v596
          %v670 = vunpack.c.l.b16 %v597
          %v671 = vunpack.c.l.b16 %v598
          %v672 = vunpack.c.l.b16 %v599
          %v673 = vunpack.c.l.b16 %v600
          %v674 = vunpack.c.l.b16 %v601
          %v675 = vunpack.c.l.b16 %v602
          %v676 = vunpack.c.l.b16 %v603
          %v677 = vunpack.c.l.b16 %v604
          %v678 = vunpack.c.l.b16 %v605
          %v679 = vunpack.c.l.b16 %v606
          %v680 = vpack.c.b16 %v649, %v648
          %v681 = vpack.c.b16 %v651, %v650
          %v682 = vpack.c.b16 %v653, %v652
          %v683 = vpack.c.b16 %v655, %v654
          %v684 = vpack.c.b16 %v657, %v656
          %v685 = vpack.c.b16 %v659, %v658
          %v686 = vpack.c.b16 %v661, %v660
          %v687 = vpack.c.b16 %v663, %v662
          %v688 = vpack.c.b16 %v665, %v664
          %v689 = vpack.c.b16 %v667, %v666
          %v690 = vpack.c.b16 %v669, %v668
          %v691 = vpack.c.b16 %v671, %v670
          %v692 = vpack.c.b16 %v673, %v672
          %v693 = vpack.c.b16 %v675, %v674
          %v694 = vpack.c.b16 %v677, %v676
          %v695 = vpack.c.b16 %v679, %v678
          %v698 = vunpack.c.l.b16 %v607
          %v699 = vunpack.c.l.b16 %v608
          %v700 = vpack.c.b16 %v699, %v698
          %vm702 = vcmask 130048
          %v704 = vsel %vm702, %v680, 0
          %v707 = vsel %vm702, %v681, 0
          %v710 = vsel %vm702, %v682, 0
          %v713 = vsel %vm702, %v683, 0
          %v716 = vsel %vm702, %v684, 0
          %v719 = vsel %vm702, %v685, 0
          %v722 = vsel %vm702, %v686, 0
          %v725 = vsel %vm702, %v687, 0
          %v728 = vsel %vm702, %v688, 0
          %v731 = vsel %vm702, %v689, 0
          %v734 = vsel %vm702, %v690, 0
          %v737 = vsel %vm702, %v691, 0
          %v740 = vsel %vm702, %v692, 0
          %v743 = vsel %vm702, %v693, 0
          %v746 = vsel %vm702, %v694, 0
          %v749 = vsel %vm702, %v695, 0
          %751 = vmatprep.subr.bf16.mxu0 0
          %752 = vmatpush1.bf16.msra.mxu0 0
          %753 = vmatprep.subr.bf16.mxu0 0
          %754 = vmatpush1.bf16.msra.mxu0 0
          %755 = vmatprep.subr.bf16.mxu0 0
          %756 = vmatpush1.bf16.msra.mxu0 0
          %757 = vmatprep.subr.bf16.mxu0 0
          %758 = vmatpush1.bf16.msra.mxu0 0
          %759 = vmatprep.subr.bf16.mxu0 0
          %760 = vmatpush1.bf16.msra.mxu0 0
          %761 = vmatprep.subr.bf16.mxu0 0
          %762 = vmatpush1.bf16.msra.mxu0 0
          %763 = vmatprep.subr.bf16.mxu0 0
          %764 = vmatpush1.bf16.msra.mxu0 0
          %765 = vmatprep.subr.bf16.mxu0 0
          %766 = vmatpush1.bf16.msra.mxu0 %v700
          %767 = vmatprep.subr.bf16.mxu0 0
          %768 = vmatpush2.bf16.msra.mxu0 0
          %769 = vmatprep.subr.bf16.mxu0 0
          %770 = vmatpush2.bf16.msra.mxu0 0
          %771 = vmatprep.subr.bf16.mxu0 0
          %772 = vmatpush2.bf16.msra.mxu0 0
          %773 = vmatprep.subr.bf16.mxu0 0
          %774 = vmatpush2.bf16.msra.mxu0 0
          %775 = vmatprep.subr.bf16.mxu0 0
          %776 = vmatpush2.bf16.msra.mxu0 0
          %777 = vmatprep.subr.bf16.mxu0 0
          %778 = vmatpush2.bf16.msra.mxu0 0
          %779 = vmatprep.subr.bf16.mxu0 0
          %780 = vmatpush2.bf16.msra.mxu0 0
          %781 = vmatprep.subr.bf16.mxu0 0
          %782 = vmatpush2.bf16.msra.mxu0 0
          %783 = vmatprep.mubr.bf16.mxu0 0
          %784 = vmatmul.mubr.bf16.gmra.mxu0 %v704
          %v785 = vpop.f32.mrf.mxu0
          %v786 = vadd.f32 %v614, %v785
          %v787 = vpop.f32.mrf.mxu0
          %v788 = vpop.f32.mrf.mxu0
          %v789 = vadd.f32 %v614, %v788
          %v790 = vpop.f32.mrf.mxu0
          %791 = vmatprep.mubr.bf16.mxu0 0
          %792 = vmatmul.mubr.bf16.gmra.mxu0 %v707
          %v793 = vpop.f32.mrf.mxu0
          %v794 = vadd.f32 %v614, %v793
          %v795 = vpop.f32.mrf.mxu0
          %v796 = vpop.f32.mrf.mxu0
          %v797 = vadd.f32 %v614, %v796
          %v798 = vpop.f32.mrf.mxu0
          %799 = vmatprep.mubr.bf16.mxu0 0
          %800 = vmatmul.mubr.bf16.gmra.mxu0 %v710
          %v801 = vpop.f32.mrf.mxu0
          %v802 = vadd.f32 %v614, %v801
          %v803 = vpop.f32.mrf.mxu0
          %v804 = vpop.f32.mrf.mxu0
          %v805 = vadd.f32 %v614, %v804
          %v806 = vpop.f32.mrf.mxu0
          %807 = vmatprep.mubr.bf16.mxu0 0
          %808 = vmatmul.mubr.bf16.gmra.mxu0 %v713
          %v809 = vpop.f32.mrf.mxu0
          %v810 = vadd.f32 %v614, %v809
          %v811 = vpop.f32.mrf.mxu0
          %v812 = vpop.f32.mrf.mxu0
          %v813 = vadd.f32 %v614, %v812
          %v814 = vpop.f32.mrf.mxu0
          %815 = vmatprep.mubr.bf16.mxu0 0
          %816 = vmatmul.mubr.bf16.gmra.mxu0 %v716
          %v817 = vpop.f32.mrf.mxu0
          %v818 = vadd.f32 %v614, %v817
          %v819 = vpop.f32.mrf.mxu0
          %v820 = vpop.f32.mrf.mxu0
          %v821 = vadd.f32 %v614, %v820
          %v822 = vpop.f32.mrf.mxu0
          %823 = vmatprep.mubr.bf16.mxu0 0
          %824 = vmatmul.mubr.bf16.gmra.mxu0 %v719
          %v825 = vpop.f32.mrf.mxu0
          %v826 = vadd.f32 %v614, %v825
          %v827 = vpop.f32.mrf.mxu0
          %v828 = vpop.f32.mrf.mxu0
          %v829 = vadd.f32 %v614, %v828
          %v830 = vpop.f32.mrf.mxu0
          %831 = vmatprep.mubr.bf16.mxu0 0
          %832 = vmatmul.mubr.bf16.gmra.mxu0 %v722
          %v833 = vpop.f32.mrf.mxu0
          %v834 = vadd.f32 %v614, %v833
          %v835 = vpop.f32.mrf.mxu0
          %v836 = vpop.f32.mrf.mxu0
          %v837 = vadd.f32 %v614, %v836
          %v838 = vpop.f32.mrf.mxu0
          %839 = vmatprep.mubr.bf16.mxu0 0
          %840 = vmatmul.mubr.bf16.gmra.mxu0 %v725
          %v841 = vpop.f32.mrf.mxu0
          %v842 = vadd.f32 %v614, %v841
          %v843 = vpop.f32.mrf.mxu0
          %v844 = vpop.f32.mrf.mxu0
          %v845 = vadd.f32 %v614, %v844
          %v846 = vpop.f32.mrf.mxu0
          %847 = vmatprep.mubr.bf16.mxu0 0
          %848 = vmatmul.mubr.bf16.gmra.mxu0 %v728
          %v849 = vpop.f32.mrf.mxu0
          %v850 = vadd.f32 %v614, %v849
          %v851 = vpop.f32.mrf.mxu0
          %v852 = vpop.f32.mrf.mxu0
          %v853 = vadd.f32 %v614, %v852
          %v854 = vpop.f32.mrf.mxu0
          %855 = vmatprep.mubr.bf16.mxu0 0
          %856 = vmatmul.mubr.bf16.gmra.mxu0 %v731
          %v857 = vpop.f32.mrf.mxu0
          %v858 = vadd.f32 %v614, %v857
          %v859 = vpop.f32.mrf.mxu0
          %v860 = vpop.f32.mrf.mxu0
          %v861 = vadd.f32 %v614, %v860
          %v862 = vpop.f32.mrf.mxu0
          %863 = vmatprep.mubr.bf16.mxu0 0
          %864 = vmatmul.mubr.bf16.gmra.mxu0 %v734
          %v865 = vpop.f32.mrf.mxu0
          %v866 = vadd.f32 %v614, %v865
          %v867 = vpop.f32.mrf.mxu0
          %v868 = vpop.f32.mrf.mxu0
          %v869 = vadd.f32 %v614, %v868
          %v870 = vpop.f32.mrf.mxu0
          %871 = vmatprep.mubr.bf16.mxu0 0
          %872 = vmatmul.mubr.bf16.gmra.mxu0 %v737
          %v873 = vpop.f32.mrf.mxu0
          %v874 = vadd.f32 %v614, %v873
          %v875 = vpop.f32.mrf.mxu0
          %v876 = vpop.f32.mrf.mxu0
          %v877 = vadd.f32 %v614, %v876
          %v878 = vpop.f32.mrf.mxu0
          %879 = vmatprep.mubr.bf16.mxu0 0
          %880 = vmatmul.mubr.bf16.gmra.mxu0 %v740
          %v881 = vpop.f32.mrf.mxu0
          %v882 = vadd.f32 %v614, %v881
          %v883 = vpop.f32.mrf.mxu0
          %v884 = vpop.f32.mrf.mxu0
          %v885 = vadd.f32 %v614, %v884
          %v886 = vpop.f32.mrf.mxu0
          %887 = vmatprep.mubr.bf16.mxu0 0
          %888 = vmatmul.mubr.bf16.gmra.mxu0 %v743
          %v889 = vpop.f32.mrf.mxu0
          %v890 = vadd.f32 %v614, %v889
          %v891 = vpop.f32.mrf.mxu0
          %v892 = vpop.f32.mrf.mxu0
          %v893 = vadd.f32 %v614, %v892
          %v894 = vpop.f32.mrf.mxu0
          %895 = vmatprep.mubr.bf16.mxu0 0
          %896 = vmatmul.mubr.bf16.gmra.mxu0 %v746
          %v897 = vpop.f32.mrf.mxu0
          %v898 = vadd.f32 %v614, %v897
          %v899 = vpop.f32.mrf.mxu0
          %v900 = vpop.f32.mrf.mxu0
          %v901 = vadd.f32 %v614, %v900
          %v902 = vpop.f32.mrf.mxu0
          %903 = vmatprep.mubr.bf16.mxu0 0
          %904 = vmatmul.mubr.bf16.gmra.mxu0 %v749
          %v905 = vpop.f32.mrf.mxu0
          %v906 = vadd.f32 %v614, %v905
          %v907 = vpop.f32.mrf.mxu0
          %v908 = vpop.f32.mrf.mxu0
          %v909 = vadd.f32 %v614, %v908
          %v910 = vpop.f32.mrf.mxu0
          %911 = vdwg.mxu0
          %912 = vst [vmem:[#allocation2] sm:$0xff] %v786
          %913 = vst [vmem:[#allocation2 + $0x8] sm:$0xff] %v789
          %914 = vst [vmem:[#allocation2 + $0x10] sm:$0xff] %v794
          %915 = vst [vmem:[#allocation2 + $0x18] sm:$0xff] %v797
          %916 = vst [vmem:[#allocation2 + $0x20] sm:$0xff] %v802
          %917 = vst [vmem:[#allocation2 + $0x28] sm:$0xff] %v805
          %918 = vst [vmem:[#allocation2 + $0x30] sm:$0xff] %v810
          %919 = vst [vmem:[#allocation2 + $0x38] sm:$0xff] %v813
          %920 = vst [vmem:[#allocation2 + $0x40] sm:$0xff] %v818
          %921 = vst [vmem:[#allocation2 + $0x48] sm:$0xff] %v821
          %922 = vst [vmem:[#allocation2 + $0x50] sm:$0xff] %v826
          %923 = vst [vmem:[#allocation2 + $0x58] sm:$0xff] %v829
          %924 = vst [vmem:[#allocation2 + $0x60] sm:$0xff] %v834
          %925 = vst [vmem:[#allocation2 + $0x68] sm:$0xff] %v837
          %926 = vst [vmem:[#allocation2 + $0x70] sm:$0xff] %v842
          %927 = vst [vmem:[#allocation2 + $0x78] sm:$0xff] %v845
          %928 = vst [vmem:[#allocation2 + $0x80] sm:$0xff] %v850
          %929 = vst [vmem:[#allocation2 + $0x88] sm:$0xff] %v853
          %930 = vst [vmem:[#allocation2 + $0x90] sm:$0xff] %v858
          %931 = vst [vmem:[#allocation2 + $0x98] sm:$0xff] %v861
          %932 = vst [vmem:[#allocation2 + $0xa0] sm:$0xff] %v866
          %933 = vst [vmem:[#allocation2 + $0xa8] sm:$0xff] %v869
          %934 = vst [vmem:[#allocation2 + $0xb0] sm:$0xff] %v874
          %935 = vst [vmem:[#allocation2 + $0xb8] sm:$0xff] %v877
          %936 = vst [vmem:[#allocation2 + $0xc0] sm:$0xff] %v882
          %937 = vst [vmem:[#allocation2 + $0xc8] sm:$0xff] %v885
          %938 = vst [vmem:[#allocation2 + $0xd0] sm:$0xff] %v890
          %939 = vst [vmem:[#allocation2 + $0xd8] sm:$0xff] %v893
          %940 = vst [vmem:[#allocation2 + $0xe0] sm:$0xff] %v898
          %941 = vst [vmem:[#allocation2 + $0xe8] sm:$0xff] %v901
          %942 = vst [vmem:[#allocation2 + $0xf0] sm:$0xff] %v906
          %943 = vst [vmem:[#allocation2 + $0xf8] sm:$0xff] %v909
          %944 = vst [vmem:[#allocation4] sm:$0xf] 0.0
        $region96: #{tpu_custom_call.1} parent=71 // pred_fallthru
          _
        %s945 = smul.u32 %s35, 128
        %p946 = scmp.lt.s32.totalorder %s34, 0
        %s947 = ssub.s32 0, %s34
        %s948 = scalar_select %p946, %s947, %s34
        %s949 = sand.u32 %s948, 1
        %s950 = ssub.s32 0, %s949
        %s951 = scalar_select %p946, %s950, %s949
        %p952 = scmp.ne.s32.totalorder %s951, 0
        %p953 = scmp.lt.s32.totalorder %s951, 0
        %p954 = pnand %p953, %p952
        %p955 = pneg %p954
        %s956 = sadd.s32 %s951, 2
        %s957 = scalar_select %p955, %s956, %s951
        %p958 = scmp.eq.s32.totalorder %s957, 0
        // Predicated region
        $region97: #{tpu_custom_call.1} parent=71 // pred_check
          %p959 = pneg %p958
        $region98: #{tpu_custom_call.1} parent=71 // pred_check_branch
          %961 = sbr.rel (%p959) target = $region100
        $region99: #{tpu_custom_call.1} parent=71 // pred_region
          %v962 = vld [vmem:[%s557] sm:$0xff]
          %v963 = vld [vmem:[%s557 + $0x8] sm:$0xff]
          %v964 = vld [vmem:[%s557 + $0x10] sm:$0xff]
          %v965 = vld [vmem:[%s557 + $0x18] sm:$0xff]
          %v966 = vld [vmem:[%s557 + $0x20] sm:$0xff]
          %v967 = vld [vmem:[%s557 + $0x28] sm:$0xff]
          %v968 = vld [vmem:[%s557 + $0x30] sm:$0xff]
          %v969 = vld [vmem:[%s557 + $0x38] sm:$0xff]
          %v970 = vld [vmem:[%s557 + $0x40] sm:$0xff]
          %v971 = vld [vmem:[%s557 + $0x48] sm:$0xff]
          %v972 = vld [vmem:[%s557 + $0x50] sm:$0xff]
          %v973 = vld [vmem:[%s557 + $0x58] sm:$0xff]
          %v974 = vld [vmem:[%s557 + $0x60] sm:$0xff]
          %v975 = vld [vmem:[%s557 + $0x68] sm:$0xff]
          %v976 = vld [vmem:[%s557 + $0x70] sm:$0xff]
          %v977 = vld [vmem:[%s557 + $0x78] sm:$0xff]
          %v978 = vld [vmem:[#allocation2] sm:$0xff]
          %v979 = vld [vmem:[#allocation2 + $0x8] sm:$0xff]
          %v980 = vld [vmem:[#allocation2 + $0x10] sm:$0xff]
          %v981 = vld [vmem:[#allocation2 + $0x18] sm:$0xff]
          %v982 = vld [vmem:[#allocation2 + $0x20] sm:$0xff]
          %v983 = vld [vmem:[#allocation2 + $0x28] sm:$0xff]
          %v984 = vld [vmem:[#allocation2 + $0x30] sm:$0xff]
          %v985 = vld [vmem:[#allocation2 + $0x38] sm:$0xff]
          %v986 = vld [vmem:[#allocation2 + $0x40] sm:$0xff]
          %v987 = vld [vmem:[#allocation2 + $0x48] sm:$0xff]
          %v988 = vld [vmem:[#allocation2 + $0x50] sm:$0xff]
          %v989 = vld [vmem:[#allocation2 + $0x58] sm:$0xff]
          %v990 = vld [vmem:[#allocation2 + $0x60] sm:$0xff]
          %v991 = vld [vmem:[#allocation2 + $0x68] sm:$0xff]
          %v992 = vld [vmem:[#allocation2 + $0x70] sm:$0xff]
          %v993 = vld [vmem:[#allocation2 + $0x78] sm:$0xff]
          %v994 = vld [vmem:[#allocation2 + $0x80] sm:$0xff]
          %v995 = vld [vmem:[#allocation2 + $0x88] sm:$0xff]
          %v996 = vld [vmem:[#allocation2 + $0x90] sm:$0xff]
          %v997 = vld [vmem:[#allocation2 + $0x98] sm:$0xff]
          %v998 = vld [vmem:[#allocation2 + $0xa0] sm:$0xff]
          %v999 = vld [vmem:[#allocation2 + $0xa8] sm:$0xff]
          %v1000 = vld [vmem:[#allocation2 + $0xb0] sm:$0xff]
          %v1001 = vld [vmem:[#allocation2 + $0xb8] sm:$0xff]
          %v1002 = vld [vmem:[#allocation2 + $0xc0] sm:$0xff]
          %v1003 = vld [vmem:[#allocation2 + $0xc8] sm:$0xff]
          %v1004 = vld [vmem:[#allocation2 + $0xd0] sm:$0xff]
          %v1005 = vld [vmem:[#allocation2 + $0xd8] sm:$0xff]
          %v1006 = vld [vmem:[#allocation2 + $0xe0] sm:$0xff]
          %v1007 = vld [vmem:[#allocation2 + $0xe8] sm:$0xff]
          %v1008 = vld [vmem:[#allocation2 + $0xf0] sm:$0xff]
          %v1009 = vld [vmem:[#allocation2 + $0xf8] sm:$0xff]
          %v1010 = vpack.c.bf16 %v979, %v978
          %v1011 = vpack.c.bf16 %v981, %v980
          %v1012 = vpack.c.bf16 %v983, %v982
          %v1013 = vpack.c.bf16 %v985, %v984
          %v1014 = vpack.c.bf16 %v987, %v986
          %v1015 = vpack.c.bf16 %v989, %v988
          %v1016 = vpack.c.bf16 %v991, %v990
          %v1017 = vpack.c.bf16 %v993, %v992
          %v1018 = vpack.c.bf16 %v995, %v994
          %v1019 = vpack.c.bf16 %v997, %v996
          %v1020 = vpack.c.bf16 %v999, %v998
          %v1021 = vpack.c.bf16 %v1001, %v1000
          %v1022 = vpack.c.bf16 %v1003, %v1002
          %v1023 = vpack.c.bf16 %v1005, %v1004
          %v1024 = vpack.c.bf16 %v1007, %v1006
          %v1025 = vpack.c.bf16 %v1009, %v1008
          %v1042 = vunpack.c.l.b16 %v962
          %v1043 = vunpack.c.h.b16 %v962
          %v1044 = vunpack.c.l.b16 %v963
          %v1045 = vunpack.c.h.b16 %v963
          %v1046 = vunpack.c.l.b16 %v964
          %v1047 = vunpack.c.h.b16 %v964
          %v1048 = vunpack.c.l.b16 %v965
          %v1049 = vunpack.c.h.b16 %v965
          %v1050 = vunpack.c.l.b16 %v966
          %v1051 = vunpack.c.h.b16 %v966
          %v1052 = vunpack.c.l.b16 %v967
          %v1053 = vunpack.c.h.b16 %v967
          %v1054 = vunpack.c.l.b16 %v968
          %v1055 = vunpack.c.h.b16 %v968
          %v1056 = vunpack.c.l.b16 %v969
          %v1057 = vunpack.c.h.b16 %v969
          %v1058 = vunpack.c.l.b16 %v970
          %v1059 = vunpack.c.h.b16 %v970
          %v1060 = vunpack.c.l.b16 %v971
          %v1061 = vunpack.c.h.b16 %v971
          %v1062 = vunpack.c.l.b16 %v972
          %v1063 = vunpack.c.h.b16 %v972
          %v1064 = vunpack.c.l.b16 %v973
          %v1065 = vunpack.c.h.b16 %v973
          %v1066 = vunpack.c.l.b16 %v974
          %v1067 = vunpack.c.h.b16 %v974
          %v1068 = vunpack.c.l.b16 %v975
          %v1069 = vunpack.c.h.b16 %v975
          %v1070 = vunpack.c.l.b16 %v976
          %v1071 = vunpack.c.h.b16 %v976
          %v1072 = vunpack.c.l.b16 %v977
          %v1073 = vunpack.c.h.b16 %v977
          %v1074 = vpack.c.b16 %v1044, %v1042
          %v1075 = vpack.c.b16 %v1045, %v1043
          %v1076 = vpack.c.b16 %v1048, %v1046
          %v1077 = vpack.c.b16 %v1049, %v1047
          %v1078 = vpack.c.b16 %v1052, %v1050
          %v1079 = vpack.c.b16 %v1053, %v1051
          %v1080 = vpack.c.b16 %v1056, %v1054
          %v1081 = vpack.c.b16 %v1057, %v1055
          %v1082 = vpack.c.b16 %v1060, %v1058
          %v1083 = vpack.c.b16 %v1061, %v1059
          %v1084 = vpack.c.b16 %v1064, %v1062
          %v1085 = vpack.c.b16 %v1065, %v1063
          %v1086 = vpack.c.b16 %v1068, %v1066
          %v1087 = vpack.c.b16 %v1069, %v1067
          %v1088 = vpack.c.b16 %v1072, %v1070
          %v1089 = vpack.c.b16 %v1073, %v1071
          %1106 = vmatprep.subr.bf16.mxu0 0
          %1107 = vmatpush1.bf16.msra.mxu0 %v1017
          %1108 = vmatprep.subr.bf16.mxu0 0
          %1109 = vmatpush1.bf16.msra.mxu0 %v1016
          %1110 = vmatprep.subr.bf16.mxu0 0
          %1111 = vmatpush1.bf16.msra.mxu0 %v1015
          %1112 = vmatprep.subr.bf16.mxu0 0
          %1113 = vmatpush1.bf16.msra.mxu0 %v1014
          %1114 = vmatprep.subr.bf16.mxu0 0
          %1115 = vmatpush1.bf16.msra.mxu0 %v1013
          %1116 = vmatprep.subr.bf16.mxu0 0
          %1117 = vmatpush1.bf16.msra.mxu0 %v1012
          %1118 = vmatprep.subr.bf16.mxu0 0
          %1119 = vmatpush1.bf16.msra.mxu0 %v1011
          %1120 = vmatprep.subr.bf16.mxu0 0
          %1121 = vmatpush1.bf16.msra.mxu0 %v1010
          %1122 = vmatprep.subr.bf16.mxu0 0
          %1123 = vmatpush2.bf16.msra.mxu0 %v1025
          %1124 = vmatprep.subr.bf16.mxu0 0
          %1125 = vmatpush2.bf16.msra.mxu0 %v1024
          %1126 = vmatprep.subr.bf16.mxu0 0
          %1127 = vmatpush2.bf16.msra.mxu0 %v1023
          %1128 = vmatprep.subr.bf16.mxu0 0
          %1129 = vmatpush2.bf16.msra.mxu0 %v1022
          %1130 = vmatprep.subr.bf16.mxu0 0
          %1131 = vmatpush2.bf16.msra.mxu0 %v1021
          %1132 = vmatprep.subr.bf16.mxu0 0
          %1133 = vmatpush2.bf16.msra.mxu0 %v1020
          %1134 = vmatprep.subr.bf16.mxu0 0
          %1135 = vmatpush2.bf16.msra.mxu0 %v1019
          %1136 = vmatprep.subr.bf16.mxu0 0
          %1137 = vmatpush2.bf16.msra.mxu0 %v1018
          %1138 = vmatprep.mubr.bf16.mxu0 %v1075
          %1139 = vmatmul.mubr.bf16.gmra.mxu0 %v1074
          %v1140 = vpop.f32.mrf.mxu0
          %v1141 = vadd.f32 0.0, %v1140
          %v1142 = vpop.f32.mrf.mxu0
          %v1143 = vpop.f32.mrf.mxu0
          %v1144 = vadd.f32 0.0, %v1143
          %v1145 = vpop.f32.mrf.mxu0
          %1146 = vmatprep.mubr.bf16.mxu0 %v1077
          %1147 = vmatmul.mubr.bf16.gmra.mxu0 %v1076
          %v1148 = vpop.f32.mrf.mxu0
          %v1149 = vadd.f32 0.0, %v1148
          %v1150 = vpop.f32.mrf.mxu0
          %v1151 = vpop.f32.mrf.mxu0
          %v1152 = vadd.f32 0.0, %v1151
          %v1153 = vpop.f32.mrf.mxu0
          %1154 = vmatprep.mubr.bf16.mxu0 %v1079
          %1155 = vmatmul.mubr.bf16.gmra.mxu0 %v1078
          %v1156 = vpop.f32.mrf.mxu0
          %v1157 = vadd.f32 0.0, %v1156
          %v1158 = vpop.f32.mrf.mxu0
          %v1159 = vpop.f32.mrf.mxu0
          %v1160 = vadd.f32 0.0, %v1159
          %v1161 = vpop.f32.mrf.mxu0
          %1162 = vmatprep.mubr.bf16.mxu0 %v1081
          %1163 = vmatmul.mubr.bf16.gmra.mxu0 %v1080
          %v1164 = vpop.f32.mrf.mxu0
          %v1165 = vadd.f32 0.0, %v1164
          %v1166 = vpop.f32.mrf.mxu0
          %v1167 = vpop.f32.mrf.mxu0
          %v1168 = vadd.f32 0.0, %v1167
          %v1169 = vpop.f32.mrf.mxu0
          %1170 = vmatprep.mubr.bf16.mxu0 %v1083
          %1171 = vmatmul.mubr.bf16.gmra.mxu0 %v1082
          %v1172 = vpop.f32.mrf.mxu0
          %v1173 = vadd.f32 0.0, %v1172
          %v1174 = vpop.f32.mrf.mxu0
          %v1175 = vpop.f32.mrf.mxu0
          %v1176 = vadd.f32 0.0, %v1175
          %v1177 = vpop.f32.mrf.mxu0
          %1178 = vmatprep.mubr.bf16.mxu0 %v1085
          %1179 = vmatmul.mubr.bf16.gmra.mxu0 %v1084
          %v1180 = vpop.f32.mrf.mxu0
          %v1181 = vadd.f32 0.0, %v1180
          %v1182 = vpop.f32.mrf.mxu0
          %v1183 = vpop.f32.mrf.mxu0
          %v1184 = vadd.f32 0.0, %v1183
          %v1185 = vpop.f32.mrf.mxu0
          %1186 = vmatprep.mubr.bf16.mxu0 %v1087
          %1187 = vmatmul.mubr.bf16.gmra.mxu0 %v1086
          %v1188 = vpop.f32.mrf.mxu0
          %v1189 = vadd.f32 0.0, %v1188
          %v1190 = vpop.f32.mrf.mxu0
          %v1191 = vpop.f32.mrf.mxu0
          %v1192 = vadd.f32 0.0, %v1191
          %v1193 = vpop.f32.mrf.mxu0
          %1194 = vmatprep.mubr.bf16.mxu0 %v1089
          %1195 = vmatmul.mubr.bf16.gmra.mxu0 %v1088
          %v1196 = vpop.f32.mrf.mxu0
          %v1197 = vadd.f32 0.0, %v1196
          %v1198 = vpop.f32.mrf.mxu0
          %v1199 = vpop.f32.mrf.mxu0
          %v1200 = vadd.f32 0.0, %v1199
          %v1201 = vpop.f32.mrf.mxu0
          %1202 = vdwg.mxu0
          %v1203 = vpack.c.bf16 %v1144, %v1141
          %v1204 = vpack.c.bf16 %v1152, %v1149
          %v1205 = vpack.c.bf16 %v1160, %v1157
          %v1206 = vpack.c.bf16 %v1168, %v1165
          %v1207 = vpack.c.bf16 %v1176, %v1173
          %v1208 = vpack.c.bf16 %v1184, %v1181
          %v1209 = vpack.c.bf16 %v1192, %v1189
          %v1210 = vpack.c.bf16 %v1200, %v1197
          %v1211 = vld [vmem:[%s563] sm:$0xf]
          %v1212 = vld [vmem:[%s563 + $0x4] sm:$0xf]
          %v1213 = vld [vmem:[%s563 + $0x8] sm:$0xf]
          %v1214 = vld [vmem:[%s563 + $0xc] sm:$0xf]
          %v1215 = vld [vmem:[%s563 + $0x10] sm:$0xf]
          %v1216 = vld [vmem:[%s563 + $0x14] sm:$0xf]
          %v1217 = vld [vmem:[%s563 + $0x18] sm:$0xf]
          %v1218 = vld [vmem:[%s563 + $0x1c] sm:$0xf]
          %v1219 = vld [vmem:[%s563 + $0x20] sm:$0xf]
          %v1220 = vld [vmem:[%s563 + $0x24] sm:$0xf]
          %v1221 = vld [vmem:[%s563 + $0x28] sm:$0xf]
          %v1222 = vld [vmem:[%s563 + $0x2c] sm:$0xf]
          %v1223 = vld [vmem:[%s563 + $0x30] sm:$0xf]
          %v1224 = vld [vmem:[%s563 + $0x34] sm:$0xf]
          %v1225 = vld [vmem:[%s563 + $0x38] sm:$0xf]
          %v1226 = vld [vmem:[%s563 + $0x3c] sm:$0xf]
          %v1227 = vld [vmem:[%s566] sm:$0x1]
          %v1229 = vlaneseq
          %v1230 = vshrl.u32 %v1229, 7
          %v1231 = vsub.s32 0, %v1230
          %v1232 = vrot.slane %v1227, %v1231
          %v1250 = vunpack.c.l.b16 %v1211
          %v1251 = vunpack.c.l.b16 %v1212
          %v1252 = vunpack.c.l.b16 %v1213
          %v1253 = vunpack.c.l.b16 %v1214
          %v1254 = vunpack.c.l.b16 %v1215
          %v1255 = vunpack.c.l.b16 %v1216
          %v1256 = vunpack.c.l.b16 %v1217
          %v1257 = vunpack.c.l.b16 %v1218
          %v1258 = vunpack.c.l.b16 %v1219
          %v1259 = vunpack.c.l.b16 %v1220
          %v1260 = vunpack.c.l.b16 %v1221
          %v1261 = vunpack.c.l.b16 %v1222
          %v1262 = vunpack.c.l.b16 %v1223
          %v1263 = vunpack.c.l.b16 %v1224
          %v1264 = vunpack.c.l.b16 %v1225
          %v1265 = vunpack.c.l.b16 %v1226
          %v1266 = vpack.c.b16 %v1251, %v1250
          %v1267 = vpack.c.b16 %v1253, %v1252
          %v1268 = vpack.c.b16 %v1255, %v1254
          %v1269 = vpack.c.b16 %v1257, %v1256
          %v1270 = vpack.c.b16 %v1259, %v1258
          %v1271 = vpack.c.b16 %v1261, %v1260
          %v1272 = vpack.c.b16 %v1263, %v1262
          %v1273 = vpack.c.b16 %v1265, %v1264
          %1282 = vmatprep.subr.bf16.mxu0 0
          %1283 = vmatpush1.bf16.msra.mxu0 %v1273
          %1284 = vmatprep.subr.bf16.mxu0 0
          %1285 = vmatpush1.bf16.msra.mxu0 %v1272
          %1286 = vmatprep.subr.bf16.mxu0 0
          %1287 = vmatpush1.bf16.msra.mxu0 %v1271
          %1288 = vmatprep.subr.bf16.mxu0 0
          %1289 = vmatpush1.bf16.msra.mxu0 %v1270
          %1290 = vmatprep.subr.bf16.mxu0 0
          %1291 = vmatpush1.bf16.msra.mxu0 %v1269
          %1292 = vmatprep.subr.bf16.mxu0 0
          %1293 = vmatpush1.bf16.msra.mxu0 %v1268
          %1294 = vmatprep.subr.bf16.mxu0 0
          %1295 = vmatpush1.bf16.msra.mxu0 %v1267
          %1296 = vmatprep.subr.bf16.mxu0 0
          %1297 = vmatpush1.bf16.msra.mxu0 %v1266
          %1298 = vmatprep.subr.bf16.mxu0 0
          %1299 = vmatpush2.bf16.msra.mxu0 0
          %1300 = vmatprep.subr.bf16.mxu0 0
          %1301 = vmatpush2.bf16.msra.mxu0 0
          %1302 = vmatprep.subr.bf16.mxu0 0
          %1303 = vmatpush2.bf16.msra.mxu0 0
          %1304 = vmatprep.subr.bf16.mxu0 0
          %1305 = vmatpush2.bf16.msra.mxu0 0
          %1306 = vmatprep.subr.bf16.mxu0 0
          %1307 = vmatpush2.bf16.msra.mxu0 0
          %1308 = vmatprep.subr.bf16.mxu0 0
          %1309 = vmatpush2.bf16.msra.mxu0 0
          %1310 = vmatprep.subr.bf16.mxu0 0
          %1311 = vmatpush2.bf16.msra.mxu0 0
          %1312 = vmatprep.subr.bf16.mxu0 0
          %1313 = vmatpush2.bf16.msra.mxu0 0
          %1314 = vmatprep.mubr.bf16.mxu0 0
          %1315 = vmatmul.mubr.bf16.gmra.mxu0 %v1203
          %v1316 = vpop.f32.mrf.mxu0
          %v1317 = vadd.f32 %v1232, %v1316
          %v1318 = vpop.f32.mrf.mxu0
          %v1319 = vpop.f32.mrf.mxu0
          %v1320 = vadd.f32 %v1232, %v1319
          %v1321 = vpop.f32.mrf.mxu0
          %1322 = vmatprep.mubr.bf16.mxu0 0
          %1323 = vmatmul.mubr.bf16.gmra.mxu0 %v1204
          %v1324 = vpop.f32.mrf.mxu0
          %v1325 = vadd.f32 %v1232, %v1324
          %v1326 = vpop.f32.mrf.mxu0
          %v1327 = vpop.f32.mrf.mxu0
          %v1328 = vadd.f32 %v1232, %v1327
          %v1329 = vpop.f32.mrf.mxu0
          %1330 = vmatprep.mubr.bf16.mxu0 0
          %1331 = vmatmul.mubr.bf16.gmra.mxu0 %v1205
          %v1332 = vpop.f32.mrf.mxu0
          %v1333 = vadd.f32 %v1232, %v1332
          %v1334 = vpop.f32.mrf.mxu0
          %v1335 = vpop.f32.mrf.mxu0
          %v1336 = vadd.f32 %v1232, %v1335
          %v1337 = vpop.f32.mrf.mxu0
          %1338 = vmatprep.mubr.bf16.mxu0 0
          %1339 = vmatmul.mubr.bf16.gmra.mxu0 %v1206
          %v1340 = vpop.f32.mrf.mxu0
          %v1341 = vadd.f32 %v1232, %v1340
          %v1342 = vpop.f32.mrf.mxu0
          %v1343 = vpop.f32.mrf.mxu0
          %v1344 = vadd.f32 %v1232, %v1343
          %v1345 = vpop.f32.mrf.mxu0
          %1346 = vmatprep.mubr.bf16.mxu0 0
          %1347 = vmatmul.mubr.bf16.gmra.mxu0 %v1207
          %v1348 = vpop.f32.mrf.mxu0
          %v1349 = vadd.f32 %v1232, %v1348
          %v1350 = vpop.f32.mrf.mxu0
          %v1351 = vpop.f32.mrf.mxu0
          %v1352 = vadd.f32 %v1232, %v1351
          %v1353 = vpop.f32.mrf.mxu0
          %1354 = vmatprep.mubr.bf16.mxu0 0
          %1355 = vmatmul.mubr.bf16.gmra.mxu0 %v1208
          %v1356 = vpop.f32.mrf.mxu0
          %v1357 = vadd.f32 %v1232, %v1356
          %v1358 = vpop.f32.mrf.mxu0
          %v1359 = vpop.f32.mrf.mxu0
          %v1360 = vadd.f32 %v1232, %v1359
          %v1361 = vpop.f32.mrf.mxu0
          %1362 = vmatprep.mubr.bf16.mxu0 0
          %1363 = vmatmul.mubr.bf16.gmra.mxu0 %v1209
          %v1364 = vpop.f32.mrf.mxu0
          %v1365 = vadd.f32 %v1232, %v1364
          %v1366 = vpop.f32.mrf.mxu0
          %v1367 = vpop.f32.mrf.mxu0
          %v1368 = vadd.f32 %v1232, %v1367
          %v1369 = vpop.f32.mrf.mxu0
          %1370 = vmatprep.mubr.bf16.mxu0 0
          %1371 = vmatmul.mubr.bf16.gmra.mxu0 %v1210
          %v1372 = vpop.f32.mrf.mxu0
          %v1373 = vadd.f32 %v1232, %v1372
          %v1374 = vpop.f32.mrf.mxu0
          %v1375 = vpop.f32.mrf.mxu0
          %v1376 = vadd.f32 %v1232, %v1375
          %v1377 = vpop.f32.mrf.mxu0
          %1378 = vdwg.mxu0
          %v1379 = vmax.f32 %v1317, 0.0
          %v1380 = vmax.f32 %v1320, 0.0
          %v1381 = vmax.f32 %v1325, 0.0
          %v1382 = vmax.f32 %v1328, 0.0
          %v1383 = vmax.f32 %v1333, 0.0
          %v1384 = vmax.f32 %v1336, 0.0
          %v1385 = vmax.f32 %v1341, 0.0
          %v1386 = vmax.f32 %v1344, 0.0
          %v1387 = vmax.f32 %v1349, 0.0
          %v1388 = vmax.f32 %v1352, 0.0
          %v1389 = vmax.f32 %v1357, 0.0
          %v1390 = vmax.f32 %v1360, 0.0
          %v1391 = vmax.f32 %v1365, 0.0
          %v1392 = vmax.f32 %v1368, 0.0
          %v1393 = vmax.f32 %v1373, 0.0
          %v1394 = vmax.f32 %v1376, 0.0
          %s1395 = scalar_lea.vmem [#allocation2], %s945
          %v1396 = vld [vmem:[%s1395] sm:$0xff]
          %v1397 = vld [vmem:[%s1395 + $0x8] sm:$0xff]
          %v1398 = vld [vmem:[%s1395 + $0x10] sm:$0xff]
          %v1399 = vld [vmem:[%s1395 + $0x18] sm:$0xff]
          %v1400 = vld [vmem:[%s1395 + $0x20] sm:$0xff]
          %v1401 = vld [vmem:[%s1395 + $0x28] sm:$0xff]
          %v1402 = vld [vmem:[%s1395 + $0x30] sm:$0xff]
          %v1403 = vld [vmem:[%s1395 + $0x38] sm:$0xff]
          %v1404 = vld [vmem:[%s1395 + $0x40] sm:$0xff]
          %v1405 = vld [vmem:[%s1395 + $0x48] sm:$0xff]
          %v1406 = vld [vmem:[%s1395 + $0x50] sm:$0xff]
          %v1407 = vld [vmem:[%s1395 + $0x58] sm:$0xff]
          %v1408 = vld [vmem:[%s1395 + $0x60] sm:$0xff]
          %v1409 = vld [vmem:[%s1395 + $0x68] sm:$0xff]
          %v1410 = vld [vmem:[%s1395 + $0x70] sm:$0xff]
          %v1411 = vld [vmem:[%s1395 + $0x78] sm:$0xff]
          %v1412 = vadd.f32 %v1379, %v1396
          %v1413 = vadd.f32 %v1380, %v1397
          %v1414 = vadd.f32 %v1381, %v1398
          %v1415 = vadd.f32 %v1382, %v1399
          %v1416 = vadd.f32 %v1383, %v1400
          %v1417 = vadd.f32 %v1384, %v1401
          %v1418 = vadd.f32 %v1385, %v1402
          %v1419 = vadd.f32 %v1386, %v1403
          %v1420 = vadd.f32 %v1387, %v1404
          %v1421 = vadd.f32 %v1388, %v1405
          %v1422 = vadd.f32 %v1389, %v1406
          %v1423 = vadd.f32 %v1390, %v1407
          %v1424 = vadd.f32 %v1391, %v1408
          %v1425 = vadd.f32 %v1392, %v1409
          %v1426 = vadd.f32 %v1393, %v1410
          %v1427 = vadd.f32 %v1394, %v1411
          %s1428 = scalar_lea.vmem [#allocation3], %s945
          %1429 = vst [vmem:[%s1428] sm:$0xff] %v1412
          %1430 = vst [vmem:[%s1428 + $0x8] sm:$0xff] %v1413
          %1431 = vst [vmem:[%s1428 + $0x10] sm:$0xff] %v1414
          %1432 = vst [vmem:[%s1428 + $0x18] sm:$0xff] %v1415
          %1433 = vst [vmem:[%s1428 + $0x20] sm:$0xff] %v1416
          %1434 = vst [vmem:[%s1428 + $0x28] sm:$0xff] %v1417
          %1435 = vst [vmem:[%s1428 + $0x30] sm:$0xff] %v1418
          %1436 = vst [vmem:[%s1428 + $0x38] sm:$0xff] %v1419
          %1437 = vst [vmem:[%s1428 + $0x40] sm:$0xff] %v1420
          %1438 = vst [vmem:[%s1428 + $0x48] sm:$0xff] %v1421
          %1439 = vst [vmem:[%s1428 + $0x50] sm:$0xff] %v1422
          %1440 = vst [vmem:[%s1428 + $0x58] sm:$0xff] %v1423
          %1441 = vst [vmem:[%s1428 + $0x60] sm:$0xff] %v1424
          %1442 = vst [vmem:[%s1428 + $0x68] sm:$0xff] %v1425
          %1443 = vst [vmem:[%s1428 + $0x70] sm:$0xff] %v1426
          %1444 = vst [vmem:[%s1428 + $0x78] sm:$0xff] %v1427
          // Predicated region
          $region101: #{tpu_custom_call.1} parent=99 // pred_check
            %p1445 = pneg %p568
          $region102: #{tpu_custom_call.1} parent=99 // pred_check_branch
            %1447 = sbr.rel (%p1445) target = $region104
          $region103: #{tpu_custom_call.1} parent=99 // pred_region
            %v1448 = vld [vmem:[#allocation4] sm:$0xf]
            %v1449 = vld [vmem:[%s484] sm:$0xf]
            %1450 = vmatprep.subr.mxu0 0.0
            %1451 = vmatpush1.msra.mxu0 %v1427
            %1452 = vmatprep.subr.mxu0 0.0
            %1453 = vmatpush1.msra.mxu0 %v1426
            %1454 = vmatprep.subr.mxu0 0.0
            %1455 = vmatpush1.msra.mxu0 %v1425
            %1456 = vmatprep.subr.mxu0 0.0
            %1457 = vmatpush1.msra.mxu0 %v1424
            %1458 = vmatprep.subr.mxu0 0.0
            %1459 = vmatpush1.msra.mxu0 %v1423
            %1460 = vmatprep.subr.mxu0 0.0
            %1461 = vmatpush1.msra.mxu0 %v1422
            %1462 = vmatprep.subr.mxu0 0.0
            %1463 = vmatpush1.msra.mxu0 %v1421
            %1464 = vmatprep.subr.mxu0 0.0
            %1465 = vmatpush1.msra.mxu0 %v1420
            %1466 = vmatprep.subr.mxu0 0.0
            %1467 = vmatpush1.msra.mxu0 %v1419
            %1468 = vmatprep.subr.mxu0 0.0
            %1469 = vmatpush1.msra.mxu0 %v1418
            %1470 = vmatprep.subr.mxu0 0.0
            %1471 = vmatpush1.msra.mxu0 %v1417
            %1472 = vmatprep.subr.mxu0 0.0
            %1473 = vmatpush1.msra.mxu0 %v1416
            %1474 = vmatprep.subr.mxu0 0.0
            %1475 = vmatpush1.msra.mxu0 %v1415
            %1476 = vmatprep.subr.mxu0 0.0
            %1477 = vmatpush1.msra.mxu0 %v1414
            %1478 = vmatprep.subr.mxu0 0.0
            %1479 = vmatpush1.msra.mxu0 %v1413
            %1480 = vmatprep.subr.mxu0 0.0
            %1481 = vmatpush1.msra.mxu0 %v1412
            %1482 = vmatprep.subr.mxu0 0.0
            %1483 = vmatpush2.msra.mxu0 0.0
            %1484 = vmatprep.subr.mxu0 0.0
            %1485 = vmatpush2.msra.mxu0 0.0
            %1486 = vmatprep.subr.mxu0 0.0
            %1487 = vmatpush2.msra.mxu0 0.0
            %1488 = vmatprep.subr.mxu0 0.0
            %1489 = vmatpush2.msra.mxu0 0.0
            %1490 = vmatprep.subr.mxu0 0.0
            %1491 = vmatpush2.msra.mxu0 0.0
            %1492 = vmatprep.subr.mxu0 0.0
            %1493 = vmatpush2.msra.mxu0 0.0
            %1494 = vmatprep.subr.mxu0 0.0
            %1495 = vmatpush2.msra.mxu0 0.0
            %1496 = vmatprep.subr.mxu0 0.0
            %1497 = vmatpush2.msra.mxu0 0.0
            %1498 = vmatprep.subr.mxu0 0.0
            %1499 = vmatpush2.msra.mxu0 0.0
            %1500 = vmatprep.subr.mxu0 0.0
            %1501 = vmatpush2.msra.mxu0 0.0
            %1502 = vmatprep.subr.mxu0 0.0
            %1503 = vmatpush2.msra.mxu0 0.0
            %1504 = vmatprep.subr.mxu0 0.0
            %1505 = vmatpush2.msra.mxu0 0.0
            %1506 = vmatprep.subr.mxu0 0.0
            %1507 = vmatpush2.msra.mxu0 0.0
            %1508 = vmatprep.subr.mxu0 0.0
            %1509 = vmatpush2.msra.mxu0 0.0
            %1510 = vmatprep.subr.mxu0 0.0
            %1511 = vmatpush2.msra.mxu0 0.0
            %1512 = vmatprep.subr.mxu0 0.0
            %1513 = vmatpush2.msra.mxu0 0.0
            %1514 = vmatprep.mubr.f32.mxu0 0.0
            %1515 = vmatmul.mubr.f32.gmra.mxu0 %v1449
            %v1516 = vpop.f32.mrf.mxu0
            %v1517 = vadd.f32 0.0, %v1516
            %v1518 = vpop.f32.mrf.mxu0
            %1519 = vdwg.mxu0
            %v1520 = vadd.f32 %v1448, %v1517
            %1521 = vst [vmem:[#allocation4] sm:$0xf] %v1520
          $region104: #{tpu_custom_call.1} parent=99 // pred_fallthru
            _
        $region100: #{tpu_custom_call.1} parent=71 // pred_fallthru
          _
        %p1522 = scmp.eq.s32.totalorder %s957, 1
        // Predicated region
        $region105: #{tpu_custom_call.1} parent=71 // pred_check
          %p1523 = pneg %p1522
        $region106: #{tpu_custom_call.1} parent=71 // pred_check_branch
          %1525 = sbr.rel (%p1523) target = $region108
        $region107: #{tpu_custom_call.1} parent=71 // pred_region
          %v1526 = vld [vmem:[%s557] sm:$0xff]
          %v1527 = vld [vmem:[%s557 + $0x8] sm:$0xff]
          %v1528 = vld [vmem:[%s557 + $0x10] sm:$0xff]
          %v1529 = vld [vmem:[%s557 + $0x18] sm:$0xff]
          %v1530 = vld [vmem:[%s557 + $0x20] sm:$0xff]
          %v1531 = vld [vmem:[%s557 + $0x28] sm:$0xff]
          %v1532 = vld [vmem:[%s557 + $0x30] sm:$0xff]
          %v1533 = vld [vmem:[%s557 + $0x38] sm:$0xff]
          %v1534 = vld [vmem:[%s557 + $0x40] sm:$0xff]
          %v1535 = vld [vmem:[%s557 + $0x48] sm:$0xff]
          %v1536 = vld [vmem:[%s557 + $0x50] sm:$0xff]
          %v1537 = vld [vmem:[%s557 + $0x58] sm:$0xff]
          %v1538 = vld [vmem:[%s557 + $0x60] sm:$0xff]
          %v1539 = vld [vmem:[%s557 + $0x68] sm:$0xff]
          %v1540 = vld [vmem:[%s557 + $0x70] sm:$0xff]
          %v1541 = vld [vmem:[%s557 + $0x78] sm:$0xff]
          %v1542 = vld [vmem:[#allocation3] sm:$0xff]
          %v1543 = vld [vmem:[#allocation3 + $0x8] sm:$0xff]
          %v1544 = vld [vmem:[#allocation3 + $0x10] sm:$0xff]
          %v1545 = vld [vmem:[#allocation3 + $0x18] sm:$0xff]
          %v1546 = vld [vmem:[#allocation3 + $0x20] sm:$0xff]
          %v1547 = vld [vmem:[#allocation3 + $0x28] sm:$0xff]
          %v1548 = vld [vmem:[#allocation3 + $0x30] sm:$0xff]
          %v1549 = vld [vmem:[#allocation3 + $0x38] sm:$0xff]
          %v1550 = vld [vmem:[#allocation3 + $0x40] sm:$0xff]
          %v1551 = vld [vmem:[#allocation3 + $0x48] sm:$0xff]
          %v1552 = vld [vmem:[#allocation3 + $0x50] sm:$0xff]
          %v1553 = vld [vmem:[#allocation3 + $0x58] sm:$0xff]
          %v1554 = vld [vmem:[#allocation3 + $0x60] sm:$0xff]
          %v1555 = vld [vmem:[#allocation3 + $0x68] sm:$0xff]
          %v1556 = vld [vmem:[#allocation3 + $0x70] sm:$0xff]
          %v1557 = vld [vmem:[#allocation3 + $0x78] sm:$0xff]
          %v1558 = vld [vmem:[#allocation3 + $0x80] sm:$0xff]
          %v1559 = vld [vmem:[#allocation3 + $0x88] sm:$0xff]
          %v1560 = vld [vmem:[#allocation3 + $0x90] sm:$0xff]
          %v1561 = vld [vmem:[#allocation3 + $0x98] sm:$0xff]
          %v1562 = vld [vmem:[#allocation3 + $0xa0] sm:$0xff]
          %v1563 = vld [vmem:[#allocation3 + $0xa8] sm:$0xff]
          %v1564 = vld [vmem:[#allocation3 + $0xb0] sm:$0xff]
          %v1565 = vld [vmem:[#allocation3 + $0xb8] sm:$0xff]
          %v1566 = vld [vmem:[#allocation3 + $0xc0] sm:$0xff]
          %v1567 = vld [vmem:[#allocation3 + $0xc8] sm:$0xff]
          %v1568 = vld [vmem:[#allocation3 + $0xd0] sm:$0xff]
          %v1569 = vld [vmem:[#allocation3 + $0xd8] sm:$0xff]
          %v1570 = vld [vmem:[#allocation3 + $0xe0] sm:$0xff]
          %v1571 = vld [vmem:[#allocation3 + $0xe8] sm:$0xff]
          %v1572 = vld [vmem:[#allocation3 + $0xf0] sm:$0xff]
          %v1573 = vld [vmem:[#allocation3 + $0xf8] sm:$0xff]
          %v1574 = vpack.c.bf16 %v1543, %v1542
          %v1575 = vpack.c.bf16 %v1545, %v1544
          %v1576 = vpack.c.bf16 %v1547, %v1546
          %v1577 = vpack.c.bf16 %v1549, %v1548
          %v1578 = vpack.c.bf16 %v1551, %v1550
          %v1579 = vpack.c.bf16 %v1553, %v1552
          %v1580 = vpack.c.bf16 %v1555, %v1554
          %v1581 = vpack.c.bf16 %v1557, %v1556
          %v1582 = vpack.c.bf16 %v1559, %v1558
          %v1583 = vpack.c.bf16 %v1561, %v1560
          %v1584 = vpack.c.bf16 %v1563, %v1562
          %v1585 = vpack.c.bf16 %v1565, %v1564
          %v1586 = vpack.c.bf16 %v1567, %v1566
          %v1587 = vpack.c.bf16 %v1569, %v1568
          %v1588 = vpack.c.bf16 %v1571, %v1570
          %v1589 = vpack.c.bf16 %v1573, %v1572
          %v1606 = vunpack.c.l.b16 %v1526
          %v1607 = vunpack.c.h.b16 %v1526
          %v1608 = vunpack.c.l.b16 %v1527
          %v1609 = vunpack.c.h.b16 %v1527
          %v1610 = vunpack.c.l.b16 %v1528
          %v1611 = vunpack.c.h.b16 %v1528
          %v1612 = vunpack.c.l.b16 %v1529
          %v1613 = vunpack.c.h.b16 %v1529
          %v1614 = vunpack.c.l.b16 %v1530
          %v1615 = vunpack.c.h.b16 %v1530
          %v1616 = vunpack.c.l.b16 %v1531
          %v1617 = vunpack.c.h.b16 %v1531
          %v1618 = vunpack.c.l.b16 %v1532
          %v1619 = vunpack.c.h.b16 %v1532
          %v1620 = vunpack.c.l.b16 %v1533
          %v1621 = vunpack.c.h.b16 %v1533
          %v1622 = vunpack.c.l.b16 %v1534
          %v1623 = vunpack.c.h.b16 %v1534
          %v1624 = vunpack.c.l.b16 %v1535
          %v1625 = vunpack.c.h.b16 %v1535
          %v1626 = vunpack.c.l.b16 %v1536
          %v1627 = vunpack.c.h.b16 %v1536
          %v1628 = vunpack.c.l.b16 %v1537
          %v1629 = vunpack.c.h.b16 %v1537
          %v1630 = vunpack.c.l.b16 %v1538
          %v1631 = vunpack.c.h.b16 %v1538
          %v1632 = vunpack.c.l.b16 %v1539
          %v1633 = vunpack.c.h.b16 %v1539
          %v1634 = vunpack.c.l.b16 %v1540
          %v1635 = vunpack.c.h.b16 %v1540
          %v1636 = vunpack.c.l.b16 %v1541
          %v1637 = vunpack.c.h.b16 %v1541
          %v1638 = vpack.c.b16 %v1608, %v1606
          %v1639 = vpack.c.b16 %v1609, %v1607
          %v1640 = vpack.c.b16 %v1612, %v1610
          %v1641 = vpack.c.b16 %v1613, %v1611
          %v1642 = vpack.c.b16 %v1616, %v1614
          %v1643 = vpack.c.b16 %v1617, %v1615
          %v1644 = vpack.c.b16 %v1620, %v1618
          %v1645 = vpack.c.b16 %v1621, %v1619
          %v1646 = vpack.c.b16 %v1624, %v1622
          %v1647 = vpack.c.b16 %v1625, %v1623
          %v1648 = vpack.c.b16 %v1628, %v1626
          %v1649 = vpack.c.b16 %v1629, %v1627
          %v1650 = vpack.c.b16 %v1632, %v1630
          %v1651 = vpack.c.b16 %v1633, %v1631
          %v1652 = vpack.c.b16 %v1636, %v1634
          %v1653 = vpack.c.b16 %v1637, %v1635
          %1670 = vmatprep.subr.bf16.mxu0 0
          %1671 = vmatpush1.bf16.msra.mxu0 %v1581
          %1672 = vmatprep.subr.bf16.mxu0 0
          %1673 = vmatpush1.bf16.msra.mxu0 %v1580
          %1674 = vmatprep.subr.bf16.mxu0 0
          %1675 = vmatpush1.bf16.msra.mxu0 %v1579
          %1676 = vmatprep.subr.bf16.mxu0 0
          %1677 = vmatpush1.bf16.msra.mxu0 %v1578
          %1678 = vmatprep.subr.bf16.mxu0 0
          %1679 = vmatpush1.bf16.msra.mxu0 %v1577
          %1680 = vmatprep.subr.bf16.mxu0 0
          %1681 = vmatpush1.bf16.msra.mxu0 %v1576
          %1682 = vmatprep.subr.bf16.mxu0 0
          %1683 = vmatpush1.bf16.msra.mxu0 %v1575
          %1684 = vmatprep.subr.bf16.mxu0 0
          %1685 = vmatpush1.bf16.msra.mxu0 %v1574
          %1686 = vmatprep.subr.bf16.mxu0 0
          %1687 = vmatpush2.bf16.msra.mxu0 %v1589
          %1688 = vmatprep.subr.bf16.mxu0 0
          %1689 = vmatpush2.bf16.msra.mxu0 %v1588
          %1690 = vmatprep.subr.bf16.mxu0 0
          %1691 = vmatpush2.bf16.msra.mxu0 %v1587
          %1692 = vmatprep.subr.bf16.mxu0 0
          %1693 = vmatpush2.bf16.msra.mxu0 %v1586
          %1694 = vmatprep.subr.bf16.mxu0 0
          %1695 = vmatpush2.bf16.msra.mxu0 %v1585
          %1696 = vmatprep.subr.bf16.mxu0 0
          %1697 = vmatpush2.bf16.msra.mxu0 %v1584
          %1698 = vmatprep.subr.bf16.mxu0 0
          %1699 = vmatpush2.bf16.msra.mxu0 %v1583
          %1700 = vmatprep.subr.bf16.mxu0 0
          %1701 = vmatpush2.bf16.msra.mxu0 %v1582
          %1702 = vmatprep.mubr.bf16.mxu0 %v1639
          %1703 = vmatmul.mubr.bf16.gmra.mxu0 %v1638
          %v1704 = vpop.f32.mrf.mxu0
          %v1705 = vadd.f32 0.0, %v1704
          %v1706 = vpop.f32.mrf.mxu0
          %v1707 = vpop.f32.mrf.mxu0
          %v1708 = vadd.f32 0.0, %v1707
          %v1709 = vpop.f32.mrf.mxu0
          %1710 = vmatprep.mubr.bf16.mxu0 %v1641
          %1711 = vmatmul.mubr.bf16.gmra.mxu0 %v1640
          %v1712 = vpop.f32.mrf.mxu0
          %v1713 = vadd.f32 0.0, %v1712
          %v1714 = vpop.f32.mrf.mxu0
          %v1715 = vpop.f32.mrf.mxu0
          %v1716 = vadd.f32 0.0, %v1715
          %v1717 = vpop.f32.mrf.mxu0
          %1718 = vmatprep.mubr.bf16.mxu0 %v1643
          %1719 = vmatmul.mubr.bf16.gmra.mxu0 %v1642
          %v1720 = vpop.f32.mrf.mxu0
          %v1721 = vadd.f32 0.0, %v1720
          %v1722 = vpop.f32.mrf.mxu0
          %v1723 = vpop.f32.mrf.mxu0
          %v1724 = vadd.f32 0.0, %v1723
          %v1725 = vpop.f32.mrf.mxu0
          %1726 = vmatprep.mubr.bf16.mxu0 %v1645
          %1727 = vmatmul.mubr.bf16.gmra.mxu0 %v1644
          %v1728 = vpop.f32.mrf.mxu0
          %v1729 = vadd.f32 0.0, %v1728
          %v1730 = vpop.f32.mrf.mxu0
          %v1731 = vpop.f32.mrf.mxu0
          %v1732 = vadd.f32 0.0, %v1731
          %v1733 = vpop.f32.mrf.mxu0
          %1734 = vmatprep.mubr.bf16.mxu0 %v1647
          %1735 = vmatmul.mubr.bf16.gmra.mxu0 %v1646
          %v1736 = vpop.f32.mrf.mxu0
          %v1737 = vadd.f32 0.0, %v1736
          %v1738 = vpop.f32.mrf.mxu0
          %v1739 = vpop.f32.mrf.mxu0
          %v1740 = vadd.f32 0.0, %v1739
          %v1741 = vpop.f32.mrf.mxu0
          %1742 = vmatprep.mubr.bf16.mxu0 %v1649
          %1743 = vmatmul.mubr.bf16.gmra.mxu0 %v1648
          %v1744 = vpop.f32.mrf.mxu0
          %v1745 = vadd.f32 0.0, %v1744
          %v1746 = vpop.f32.mrf.mxu0
          %v1747 = vpop.f32.mrf.mxu0
          %v1748 = vadd.f32 0.0, %v1747
          %v1749 = vpop.f32.mrf.mxu0
          %1750 = vmatprep.mubr.bf16.mxu0 %v1651
          %1751 = vmatmul.mubr.bf16.gmra.mxu0 %v1650
          %v1752 = vpop.f32.mrf.mxu0
          %v1753 = vadd.f32 0.0, %v1752
          %v1754 = vpop.f32.mrf.mxu0
          %v1755 = vpop.f32.mrf.mxu0
          %v1756 = vadd.f32 0.0, %v1755
          %v1757 = vpop.f32.mrf.mxu0
          %1758 = vmatprep.mubr.bf16.mxu0 %v1653
          %1759 = vmatmul.mubr.bf16.gmra.mxu0 %v1652
          %v1760 = vpop.f32.mrf.mxu0
          %v1761 = vadd.f32 0.0, %v1760
          %v1762 = vpop.f32.mrf.mxu0
          %v1763 = vpop.f32.mrf.mxu0
          %v1764 = vadd.f32 0.0, %v1763
          %v1765 = vpop.f32.mrf.mxu0
          %1766 = vdwg.mxu0
          %v1767 = vpack.c.bf16 %v1708, %v1705
          %v1768 = vpack.c.bf16 %v1716, %v1713
          %v1769 = vpack.c.bf16 %v1724, %v1721
          %v1770 = vpack.c.bf16 %v1732, %v1729
          %v1771 = vpack.c.bf16 %v1740, %v1737
          %v1772 = vpack.c.bf16 %v1748, %v1745
          %v1773 = vpack.c.bf16 %v1756, %v1753
          %v1774 = vpack.c.bf16 %v1764, %v1761
          %v1775 = vld [vmem:[%s563] sm:$0xf]
          %v1776 = vld [vmem:[%s563 + $0x4] sm:$0xf]
          %v1777 = vld [vmem:[%s563 + $0x8] sm:$0xf]
          %v1778 = vld [vmem:[%s563 + $0xc] sm:$0xf]
          %v1779 = vld [vmem:[%s563 + $0x10] sm:$0xf]
          %v1780 = vld [vmem:[%s563 + $0x14] sm:$0xf]
          %v1781 = vld [vmem:[%s563 + $0x18] sm:$0xf]
          %v1782 = vld [vmem:[%s563 + $0x1c] sm:$0xf]
          %v1783 = vld [vmem:[%s563 + $0x20] sm:$0xf]
          %v1784 = vld [vmem:[%s563 + $0x24] sm:$0xf]
          %v1785 = vld [vmem:[%s563 + $0x28] sm:$0xf]
          %v1786 = vld [vmem:[%s563 + $0x2c] sm:$0xf]
          %v1787 = vld [vmem:[%s563 + $0x30] sm:$0xf]
          %v1788 = vld [vmem:[%s563 + $0x34] sm:$0xf]
          %v1789 = vld [vmem:[%s563 + $0x38] sm:$0xf]
          %v1790 = vld [vmem:[%s563 + $0x3c] sm:$0xf]
          %v1791 = vld [vmem:[%s566] sm:$0x1]
          %v1793 = vlaneseq
          %v1794 = vshrl.u32 %v1793, 7
          %v1795 = vsub.s32 0, %v1794
          %v1796 = vrot.slane %v1791, %v1795
          %v1814 = vunpack.c.l.b16 %v1775
          %v1815 = vunpack.c.l.b16 %v1776
          %v1816 = vunpack.c.l.b16 %v1777
          %v1817 = vunpack.c.l.b16 %v1778
          %v1818 = vunpack.c.l.b16 %v1779
          %v1819 = vunpack.c.l.b16 %v1780
          %v1820 = vunpack.c.l.b16 %v1781
          %v1821 = vunpack.c.l.b16 %v1782
          %v1822 = vunpack.c.l.b16 %v1783
          %v1823 = vunpack.c.l.b16 %v1784
          %v1824 = vunpack.c.l.b16 %v1785
          %v1825 = vunpack.c.l.b16 %v1786
          %v1826 = vunpack.c.l.b16 %v1787
          %v1827 = vunpack.c.l.b16 %v1788
          %v1828 = vunpack.c.l.b16 %v1789
          %v1829 = vunpack.c.l.b16 %v1790
          %v1830 = vpack.c.b16 %v1815, %v1814
          %v1831 = vpack.c.b16 %v1817, %v1816
          %v1832 = vpack.c.b16 %v1819, %v1818
          %v1833 = vpack.c.b16 %v1821, %v1820
          %v1834 = vpack.c.b16 %v1823, %v1822
          %v1835 = vpack.c.b16 %v1825, %v1824
          %v1836 = vpack.c.b16 %v1827, %v1826
          %v1837 = vpack.c.b16 %v1829, %v1828
          %1846 = vmatprep.subr.bf16.mxu0 0
          %1847 = vmatpush1.bf16.msra.mxu0 %v1837
          %1848 = vmatprep.subr.bf16.mxu0 0
          %1849 = vmatpush1.bf16.msra.mxu0 %v1836
          %1850 = vmatprep.subr.bf16.mxu0 0
          %1851 = vmatpush1.bf16.msra.mxu0 %v1835
          %1852 = vmatprep.subr.bf16.mxu0 0
          %1853 = vmatpush1.bf16.msra.mxu0 %v1834
          %1854 = vmatprep.subr.bf16.mxu0 0
          %1855 = vmatpush1.bf16.msra.mxu0 %v1833
          %1856 = vmatprep.subr.bf16.mxu0 0
          %1857 = vmatpush1.bf16.msra.mxu0 %v1832
          %1858 = vmatprep.subr.bf16.mxu0 0
          %1859 = vmatpush1.bf16.msra.mxu0 %v1831
          %1860 = vmatprep.subr.bf16.mxu0 0
          %1861 = vmatpush1.bf16.msra.mxu0 %v1830
          %1862 = vmatprep.subr.bf16.mxu0 0
          %1863 = vmatpush2.bf16.msra.mxu0 0
          %1864 = vmatprep.subr.bf16.mxu0 0
          %1865 = vmatpush2.bf16.msra.mxu0 0
          %1866 = vmatprep.subr.bf16.mxu0 0
          %1867 = vmatpush2.bf16.msra.mxu0 0
          %1868 = vmatprep.subr.bf16.mxu0 0
          %1869 = vmatpush2.bf16.msra.mxu0 0
          %1870 = vmatprep.subr.bf16.mxu0 0
          %1871 = vmatpush2.bf16.msra.mxu0 0
          %1872 = vmatprep.subr.bf16.mxu0 0
          %1873 = vmatpush2.bf16.msra.mxu0 0
          %1874 = vmatprep.subr.bf16.mxu0 0
          %1875 = vmatpush2.bf16.msra.mxu0 0
          %1876 = vmatprep.subr.bf16.mxu0 0
          %1877 = vmatpush2.bf16.msra.mxu0 0
          %1878 = vmatprep.mubr.bf16.mxu0 0
          %1879 = vmatmul.mubr.bf16.gmra.mxu0 %v1767
          %v1880 = vpop.f32.mrf.mxu0
          %v1881 = vadd.f32 %v1796, %v1880
          %v1882 = vpop.f32.mrf.mxu0
          %v1883 = vpop.f32.mrf.mxu0
          %v1884 = vadd.f32 %v1796, %v1883
          %v1885 = vpop.f32.mrf.mxu0
          %1886 = vmatprep.mubr.bf16.mxu0 0
          %1887 = vmatmul.mubr.bf16.gmra.mxu0 %v1768
          %v1888 = vpop.f32.mrf.mxu0
          %v1889 = vadd.f32 %v1796, %v1888
          %v1890 = vpop.f32.mrf.mxu0
          %v1891 = vpop.f32.mrf.mxu0
          %v1892 = vadd.f32 %v1796, %v1891
          %v1893 = vpop.f32.mrf.mxu0
          %1894 = vmatprep.mubr.bf16.mxu0 0
          %1895 = vmatmul.mubr.bf16.gmra.mxu0 %v1769
          %v1896 = vpop.f32.mrf.mxu0
          %v1897 = vadd.f32 %v1796, %v1896
          %v1898 = vpop.f32.mrf.mxu0
          %v1899 = vpop.f32.mrf.mxu0
          %v1900 = vadd.f32 %v1796, %v1899
          %v1901 = vpop.f32.mrf.mxu0
          %1902 = vmatprep.mubr.bf16.mxu0 0
          %1903 = vmatmul.mubr.bf16.gmra.mxu0 %v1770
          %v1904 = vpop.f32.mrf.mxu0
          %v1905 = vadd.f32 %v1796, %v1904
          %v1906 = vpop.f32.mrf.mxu0
          %v1907 = vpop.f32.mrf.mxu0
          %v1908 = vadd.f32 %v1796, %v1907
          %v1909 = vpop.f32.mrf.mxu0
          %1910 = vmatprep.mubr.bf16.mxu0 0
          %1911 = vmatmul.mubr.bf16.gmra.mxu0 %v1771
          %v1912 = vpop.f32.mrf.mxu0
          %v1913 = vadd.f32 %v1796, %v1912
          %v1914 = vpop.f32.mrf.mxu0
          %v1915 = vpop.f32.mrf.mxu0
          %v1916 = vadd.f32 %v1796, %v1915
          %v1917 = vpop.f32.mrf.mxu0
          %1918 = vmatprep.mubr.bf16.mxu0 0
          %1919 = vmatmul.mubr.bf16.gmra.mxu0 %v1772
          %v1920 = vpop.f32.mrf.mxu0
          %v1921 = vadd.f32 %v1796, %v1920
          %v1922 = vpop.f32.mrf.mxu0
          %v1923 = vpop.f32.mrf.mxu0
          %v1924 = vadd.f32 %v1796, %v1923
          %v1925 = vpop.f32.mrf.mxu0
          %1926 = vmatprep.mubr.bf16.mxu0 0
          %1927 = vmatmul.mubr.bf16.gmra.mxu0 %v1773
          %v1928 = vpop.f32.mrf.mxu0
          %v1929 = vadd.f32 %v1796, %v1928
          %v1930 = vpop.f32.mrf.mxu0
          %v1931 = vpop.f32.mrf.mxu0
          %v1932 = vadd.f32 %v1796, %v1931
          %v1933 = vpop.f32.mrf.mxu0
          %1934 = vmatprep.mubr.bf16.mxu0 0
          %1935 = vmatmul.mubr.bf16.gmra.mxu0 %v1774
          %v1936 = vpop.f32.mrf.mxu0
          %v1937 = vadd.f32 %v1796, %v1936
          %v1938 = vpop.f32.mrf.mxu0
          %v1939 = vpop.f32.mrf.mxu0
          %v1940 = vadd.f32 %v1796, %v1939
          %v1941 = vpop.f32.mrf.mxu0
          %1942 = vdwg.mxu0
          %v1943 = vmax.f32 %v1881, 0.0
          %v1944 = vmax.f32 %v1884, 0.0
          %v1945 = vmax.f32 %v1889, 0.0
          %v1946 = vmax.f32 %v1892, 0.0
          %v1947 = vmax.f32 %v1897, 0.0
          %v1948 = vmax.f32 %v1900, 0.0
          %v1949 = vmax.f32 %v1905, 0.0
          %v1950 = vmax.f32 %v1908, 0.0
          %v1951 = vmax.f32 %v1913, 0.0
          %v1952 = vmax.f32 %v1916, 0.0
          %v1953 = vmax.f32 %v1921, 0.0
          %v1954 = vmax.f32 %v1924, 0.0
          %v1955 = vmax.f32 %v1929, 0.0
          %v1956 = vmax.f32 %v1932, 0.0
          %v1957 = vmax.f32 %v1937, 0.0
          %v1958 = vmax.f32 %v1940, 0.0
          %s1959 = scalar_lea.vmem [#allocation3], %s945
          %v1960 = vld [vmem:[%s1959] sm:$0xff]
          %v1961 = vld [vmem:[%s1959 + $0x8] sm:$0xff]
          %v1962 = vld [vmem:[%s1959 + $0x10] sm:$0xff]
          %v1963 = vld [vmem:[%s1959 + $0x18] sm:$0xff]
          %v1964 = vld [vmem:[%s1959 + $0x20] sm:$0xff]
          %v1965 = vld [vmem:[%s1959 + $0x28] sm:$0xff]
          %v1966 = vld [vmem:[%s1959 + $0x30] sm:$0xff]
          %v1967 = vld [vmem:[%s1959 + $0x38] sm:$0xff]
          %v1968 = vld [vmem:[%s1959 + $0x40] sm:$0xff]
          %v1969 = vld [vmem:[%s1959 + $0x48] sm:$0xff]
          %v1970 = vld [vmem:[%s1959 + $0x50] sm:$0xff]
          %v1971 = vld [vmem:[%s1959 + $0x58] sm:$0xff]
          %v1972 = vld [vmem:[%s1959 + $0x60] sm:$0xff]
          %v1973 = vld [vmem:[%s1959 + $0x68] sm:$0xff]
          %v1974 = vld [vmem:[%s1959 + $0x70] sm:$0xff]
          %v1975 = vld [vmem:[%s1959 + $0x78] sm:$0xff]
          %v1976 = vadd.f32 %v1943, %v1960
          %v1977 = vadd.f32 %v1944, %v1961
          %v1978 = vadd.f32 %v1945, %v1962
          %v1979 = vadd.f32 %v1946, %v1963
          %v1980 = vadd.f32 %v1947, %v1964
          %v1981 = vadd.f32 %v1948, %v1965
          %v1982 = vadd.f32 %v1949, %v1966
          %v1983 = vadd.f32 %v1950, %v1967
          %v1984 = vadd.f32 %v1951, %v1968
          %v1985 = vadd.f32 %v1952, %v1969
          %v1986 = vadd.f32 %v1953, %v1970
          %v1987 = vadd.f32 %v1954, %v1971
          %v1988 = vadd.f32 %v1955, %v1972
          %v1989 = vadd.f32 %v1956, %v1973
          %v1990 = vadd.f32 %v1957, %v1974
          %v1991 = vadd.f32 %v1958, %v1975
          %s1992 = scalar_lea.vmem [#allocation2], %s945
          %1993 = vst [vmem:[%s1992] sm:$0xff] %v1976
          %1994 = vst [vmem:[%s1992 + $0x8] sm:$0xff] %v1977
          %1995 = vst [vmem:[%s1992 + $0x10] sm:$0xff] %v1978
          %1996 = vst [vmem:[%s1992 + $0x18] sm:$0xff] %v1979
          %1997 = vst [vmem:[%s1992 + $0x20] sm:$0xff] %v1980
          %1998 = vst [vmem:[%s1992 + $0x28] sm:$0xff] %v1981
          %1999 = vst [vmem:[%s1992 + $0x30] sm:$0xff] %v1982
          %2000 = vst [vmem:[%s1992 + $0x38] sm:$0xff] %v1983
          %2001 = vst [vmem:[%s1992 + $0x40] sm:$0xff] %v1984
          %2002 = vst [vmem:[%s1992 + $0x48] sm:$0xff] %v1985
          %2003 = vst [vmem:[%s1992 + $0x50] sm:$0xff] %v1986
          %2004 = vst [vmem:[%s1992 + $0x58] sm:$0xff] %v1987
          %2005 = vst [vmem:[%s1992 + $0x60] sm:$0xff] %v1988
          %2006 = vst [vmem:[%s1992 + $0x68] sm:$0xff] %v1989
          %2007 = vst [vmem:[%s1992 + $0x70] sm:$0xff] %v1990
          %2008 = vst [vmem:[%s1992 + $0x78] sm:$0xff] %v1991
          // Predicated region
          $region109: #{tpu_custom_call.1} parent=107 // pred_check
            %p2009 = pneg %p568
          $region110: #{tpu_custom_call.1} parent=107 // pred_check_branch
            %2011 = sbr.rel (%p2009) target = $region112
          $region111: #{tpu_custom_call.1} parent=107 // pred_region
            %v2012 = vld [vmem:[#allocation4] sm:$0xf]
            %v2013 = vld [vmem:[%s484] sm:$0xf]
            %2014 = vmatprep.subr.mxu0 0.0
            %2015 = vmatpush1.msra.mxu0 %v1991
            %2016 = vmatprep.subr.mxu0 0.0
            %2017 = vmatpush1.msra.mxu0 %v1990
            %2018 = vmatprep.subr.mxu0 0.0
            %2019 = vmatpush1.msra.mxu0 %v1989
            %2020 = vmatprep.subr.mxu0 0.0
            %2021 = vmatpush1.msra.mxu0 %v1988
            %2022 = vmatprep.subr.mxu0 0.0
            %2023 = vmatpush1.msra.mxu0 %v1987
            %2024 = vmatprep.subr.mxu0 0.0
            %2025 = vmatpush1.msra.mxu0 %v1986
            %2026 = vmatprep.subr.mxu0 0.0
            %2027 = vmatpush1.msra.mxu0 %v1985
            %2028 = vmatprep.subr.mxu0 0.0
            %2029 = vmatpush1.msra.mxu0 %v1984
            %2030 = vmatprep.subr.mxu0 0.0
            %2031 = vmatpush1.msra.mxu0 %v1983
            %2032 = vmatprep.subr.mxu0 0.0
            %2033 = vmatpush1.msra.mxu0 %v1982
            %2034 = vmatprep.subr.mxu0 0.0
            %2035 = vmatpush1.msra.mxu0 %v1981
            %2036 = vmatprep.subr.mxu0 0.0
            %2037 = vmatpush1.msra.mxu0 %v1980
            %2038 = vmatprep.subr.mxu0 0.0
            %2039 = vmatpush1.msra.mxu0 %v1979
            %2040 = vmatprep.subr.mxu0 0.0
            %2041 = vmatpush1.msra.mxu0 %v1978
            %2042 = vmatprep.subr.mxu0 0.0
            %2043 = vmatpush1.msra.mxu0 %v1977
            %2044 = vmatprep.subr.mxu0 0.0
            %2045 = vmatpush1.msra.mxu0 %v1976
            %2046 = vmatprep.subr.mxu0 0.0
            %2047 = vmatpush2.msra.mxu0 0.0
            %2048 = vmatprep.subr.mxu0 0.0
            %2049 = vmatpush2.msra.mxu0 0.0
            %2050 = vmatprep.subr.mxu0 0.0
            %2051 = vmatpush2.msra.mxu0 0.0
            %2052 = vmatprep.subr.mxu0 0.0
            %2053 = vmatpush2.msra.mxu0 0.0
            %2054 = vmatprep.subr.mxu0 0.0
            %2055 = vmatpush2.msra.mxu0 0.0
            %2056 = vmatprep.subr.mxu0 0.0
            %2057 = vmatpush2.msra.mxu0 0.0
            %2058 = vmatprep.subr.mxu0 0.0
            %2059 = vmatpush2.msra.mxu0 0.0
            %2060 = vmatprep.subr.mxu0 0.0
            %2061 = vmatpush2.msra.mxu0 0.0
            %2062 = vmatprep.subr.mxu0 0.0
            %2063 = vmatpush2.msra.mxu0 0.0
            %2064 = vmatprep.subr.mxu0 0.0
            %2065 = vmatpush2.msra.mxu0 0.0
            %2066 = vmatprep.subr.mxu0 0.0
            %2067 = vmatpush2.msra.mxu0 0.0
            %2068 = vmatprep.subr.mxu0 0.0
            %2069 = vmatpush2.msra.mxu0 0.0
            %2070 = vmatprep.subr.mxu0 0.0
            %2071 = vmatpush2.msra.mxu0 0.0
            %2072 = vmatprep.subr.mxu0 0.0
            %2073 = vmatpush2.msra.mxu0 0.0
            %2074 = vmatprep.subr.mxu0 0.0
            %2075 = vmatpush2.msra.mxu0 0.0
            %2076 = vmatprep.subr.mxu0 0.0
            %2077 = vmatpush2.msra.mxu0 0.0
            %2078 = vmatprep.mubr.f32.mxu0 0.0
            %2079 = vmatmul.mubr.f32.gmra.mxu0 %v2013
            %v2080 = vpop.f32.mrf.mxu0
            %v2081 = vadd.f32 0.0, %v2080
            %v2082 = vpop.f32.mrf.mxu0
            %2083 = vdwg.mxu0
            %v2084 = vadd.f32 %v2012, %v2081
            %2085 = vst [vmem:[#allocation4] sm:$0xf] %v2084
          $region112: #{tpu_custom_call.1} parent=107 // pred_fallthru
            _
        $region108: #{tpu_custom_call.1} parent=71 // pred_fallthru
          _
        %p2086 = scmp.eq.s32.totalorder %s35, 1
        %p2087 = pnand %p568, %p2086
        %p2088 = pneg %p2087
        // Predicated region
        $region113: #{tpu_custom_call.1} parent=71 // pred_check
          _
        $region114: #{tpu_custom_call.1} parent=71 // pred_check_branch
          %2090 = sbr.rel (%p2087) target = $region116
        $region115: #{tpu_custom_call.1} parent=71 // pred_region
          %v2091 = vld [vmem:[#allocation4] sm:$0xf]
          %v2092 = vld [vmem:[%s7] sm:$0xff]
          %v2093 = vld [vmem:[%s7 + $0x8] sm:$0xff]
          %v2094 = vld [vmem:[%s7 + $0x10] sm:$0xff]
          %v2095 = vld [vmem:[%s7 + $0x18] sm:$0xff]
          %v2096 = vld [vmem:[%s7 + $0x20] sm:$0xff]
          %v2097 = vld [vmem:[%s7 + $0x28] sm:$0xff]
          %v2098 = vld [vmem:[%s7 + $0x30] sm:$0xff]
          %v2099 = vld [vmem:[%s7 + $0x38] sm:$0xff]
          %v2100 = vld [vmem:[%s7 + $0x40] sm:$0xff]
          %v2101 = vld [vmem:[%s7 + $0x48] sm:$0xff]
          %v2102 = vld [vmem:[%s7 + $0x50] sm:$0xff]
          %v2103 = vld [vmem:[%s7 + $0x58] sm:$0xff]
          %v2104 = vld [vmem:[%s7 + $0x60] sm:$0xff]
          %v2105 = vld [vmem:[%s7 + $0x68] sm:$0xff]
          %v2106 = vld [vmem:[%s7 + $0x70] sm:$0xff]
          %v2107 = vld [vmem:[%s7 + $0x78] sm:$0xff]
          %v2108 = vld [vmem:[#allocation11] sm:$0x1]
          %v2110 = vlaneseq
          %v2111 = vshrl.u32 %v2110, 7
          %v2112 = vsub.s32 0, %v2111
          %v2113 = vrot.slane %v2108, %v2112
          %2115 = vmatprep.subr.mxu0 0.0
          %2116 = vmatpush1.msra.mxu0 %v2107
          %2117 = vmatprep.subr.mxu0 0.0
          %2118 = vmatpush1.msra.mxu0 %v2106
          %2119 = vmatprep.subr.mxu0 0.0
          %2120 = vmatpush1.msra.mxu0 %v2105
          %2121 = vmatprep.subr.mxu0 0.0
          %2122 = vmatpush1.msra.mxu0 %v2104
          %2123 = vmatprep.subr.mxu0 0.0
          %2124 = vmatpush1.msra.mxu0 %v2103
          %2125 = vmatprep.subr.mxu0 0.0
          %2126 = vmatpush1.msra.mxu0 %v2102
          %2127 = vmatprep.subr.mxu0 0.0
          %2128 = vmatpush1.msra.mxu0 %v2101
          %2129 = vmatprep.subr.mxu0 0.0
          %2130 = vmatpush1.msra.mxu0 %v2100
          %2131 = vmatprep.subr.mxu0 0.0
          %2132 = vmatpush1.msra.mxu0 %v2099
          %2133 = vmatprep.subr.mxu0 0.0
          %2134 = vmatpush1.msra.mxu0 %v2098
          %2135 = vmatprep.subr.mxu0 0.0
          %2136 = vmatpush1.msra.mxu0 %v2097
          %2137 = vmatprep.subr.mxu0 0.0
          %2138 = vmatpush1.msra.mxu0 %v2096
          %2139 = vmatprep.subr.mxu0 0.0
          %2140 = vmatpush1.msra.mxu0 %v2095
          %2141 = vmatprep.subr.mxu0 0.0
          %2142 = vmatpush1.msra.mxu0 %v2094
          %2143 = vmatprep.subr.mxu0 0.0
          %2144 = vmatpush1.msra.mxu0 %v2093
          %2145 = vmatprep.subr.mxu0 0.0
          %2146 = vmatpush1.msra.mxu0 %v2092
          %2147 = vmatprep.subr.mxu0 0.0
          %2148 = vmatpush2.msra.mxu0 0.0
          %2149 = vmatprep.subr.mxu0 0.0
          %2150 = vmatpush2.msra.mxu0 0.0
          %2151 = vmatprep.subr.mxu0 0.0
          %2152 = vmatpush2.msra.mxu0 0.0
          %2153 = vmatprep.subr.mxu0 0.0
          %2154 = vmatpush2.msra.mxu0 0.0
          %2155 = vmatprep.subr.mxu0 0.0
          %2156 = vmatpush2.msra.mxu0 0.0
          %2157 = vmatprep.subr.mxu0 0.0
          %2158 = vmatpush2.msra.mxu0 0.0
          %2159 = vmatprep.subr.mxu0 0.0
          %2160 = vmatpush2.msra.mxu0 0.0
          %2161 = vmatprep.subr.mxu0 0.0
          %2162 = vmatpush2.msra.mxu0 0.0
          %2163 = vmatprep.subr.mxu0 0.0
          %2164 = vmatpush2.msra.mxu0 0.0
          %2165 = vmatprep.subr.mxu0 0.0
          %2166 = vmatpush2.msra.mxu0 0.0
          %2167 = vmatprep.subr.mxu0 0.0
          %2168 = vmatpush2.msra.mxu0 0.0
          %2169 = vmatprep.subr.mxu0 0.0
          %2170 = vmatpush2.msra.mxu0 0.0
          %2171 = vmatprep.subr.mxu0 0.0
          %2172 = vmatpush2.msra.mxu0 0.0
          %2173 = vmatprep.subr.mxu0 0.0
          %2174 = vmatpush2.msra.mxu0 0.0
          %2175 = vmatprep.subr.mxu0 0.0
          %2176 = vmatpush2.msra.mxu0 0.0
          %2177 = vmatprep.subr.mxu0 0.0
          %2178 = vmatpush2.msra.mxu0 0.0
          %2179 = vmatprep.mubr.f32.mxu0 0.0
          %2180 = vmatmul.mubr.f32.gmra.mxu0 %v2091
          %v2181 = vpop.f32.mrf.mxu0
          %v2182 = vadd.f32 %v2113, %v2181
          %v2183 = vpop.f32.mrf.mxu0
          %2184 = vdwg.mxu0
          %v2185 = vmax.f32 %v2182, 0.0
          %v2186 = vld [vmem:[%s9] sm:$0xff]
          %v2187 = vld [vmem:[%s9 + $0x8] sm:$0xff]
          %v2188 = vld [vmem:[%s9 + $0x10] sm:$0xff]
          %v2189 = vld [vmem:[%s9 + $0x18] sm:$0xff]
          %v2190 = vld [vmem:[%s9 + $0x20] sm:$0xff]
          %v2191 = vld [vmem:[%s9 + $0x28] sm:$0xff]
          %v2192 = vld [vmem:[%s9 + $0x30] sm:$0xff]
          %v2193 = vld [vmem:[%s9 + $0x38] sm:$0xff]
          %v2194 = vld [vmem:[#allocation13] sm:$0x1]
          %v2196 = vlaneseq
          %v2197 = vshrl.u32 %v2196, 7
          %v2198 = vsub.s32 0, %v2197
          %v2199 = vrot.slane %v2194, %v2198
          %vm2201 = vcmask 523264
          %v2203 = vsel %vm2201, %v2185, 0
          %2205 = vmatprep.subr.mxu0 0.0
          %2206 = vmatpush1.msra.mxu0 0.0
          %2207 = vmatprep.subr.mxu0 0.0
          %2208 = vmatpush1.msra.mxu0 0.0
          %2209 = vmatprep.subr.mxu0 0.0
          %2210 = vmatpush1.msra.mxu0 0.0
          %2211 = vmatprep.subr.mxu0 0.0
          %2212 = vmatpush1.msra.mxu0 0.0
          %2213 = vmatprep.subr.mxu0 0.0
          %2214 = vmatpush1.msra.mxu0 0.0
          %2215 = vmatprep.subr.mxu0 0.0
          %2216 = vmatpush1.msra.mxu0 0.0
          %2217 = vmatprep.subr.mxu0 0.0
          %2218 = vmatpush1.msra.mxu0 0.0
          %2219 = vmatprep.subr.mxu0 0.0
          %2220 = vmatpush1.msra.mxu0 0.0
          %2221 = vmatprep.subr.mxu0 0.0
          %2222 = vmatpush1.msra.mxu0 %v2193
          %2223 = vmatprep.subr.mxu0 0.0
          %2224 = vmatpush1.msra.mxu0 %v2192
          %2225 = vmatprep.subr.mxu0 0.0
          %2226 = vmatpush1.msra.mxu0 %v2191
          %2227 = vmatprep.subr.mxu0 0.0
          %2228 = vmatpush1.msra.mxu0 %v2190
          %2229 = vmatprep.subr.mxu0 0.0
          %2230 = vmatpush1.msra.mxu0 %v2189
          %2231 = vmatprep.subr.mxu0 0.0
          %2232 = vmatpush1.msra.mxu0 %v2188
          %2233 = vmatprep.subr.mxu0 0.0
          %2234 = vmatpush1.msra.mxu0 %v2187
          %2235 = vmatprep.subr.mxu0 0.0
          %2236 = vmatpush1.msra.mxu0 %v2186
          %2237 = vmatprep.subr.mxu0 0.0
          %2238 = vmatpush2.msra.mxu0 0.0
          %2239 = vmatprep.subr.mxu0 0.0
          %2240 = vmatpush2.msra.mxu0 0.0
          %2241 = vmatprep.subr.mxu0 0.0
          %2242 = vmatpush2.msra.mxu0 0.0
          %2243 = vmatprep.subr.mxu0 0.0
          %2244 = vmatpush2.msra.mxu0 0.0
          %2245 = vmatprep.subr.mxu0 0.0
          %2246 = vmatpush2.msra.mxu0 0.0
          %2247 = vmatprep.subr.mxu0 0.0
          %2248 = vmatpush2.msra.mxu0 0.0
          %2249 = vmatprep.subr.mxu0 0.0
          %2250 = vmatpush2.msra.mxu0 0.0
          %2251 = vmatprep.subr.mxu0 0.0
          %2252 = vmatpush2.msra.mxu0 0.0
          %2253 = vmatprep.subr.mxu0 0.0
          %2254 = vmatpush2.msra.mxu0 0.0
          %2255 = vmatprep.subr.mxu0 0.0
          %2256 = vmatpush2.msra.mxu0 0.0
          %2257 = vmatprep.subr.mxu0 0.0
          %2258 = vmatpush2.msra.mxu0 0.0
          %2259 = vmatprep.subr.mxu0 0.0
          %2260 = vmatpush2.msra.mxu0 0.0
          %2261 = vmatprep.subr.mxu0 0.0
          %2262 = vmatpush2.msra.mxu0 0.0
          %2263 = vmatprep.subr.mxu0 0.0
          %2264 = vmatpush2.msra.mxu0 0.0
          %2265 = vmatprep.subr.mxu0 0.0
          %2266 = vmatpush2.msra.mxu0 0.0
          %2267 = vmatprep.subr.mxu0 0.0
          %2268 = vmatpush2.msra.mxu0 0.0
          %2269 = vmatprep.mubr.f32.mxu0 0.0
          %2270 = vmatmul.mubr.f32.gmra.mxu0 %v2203
          %v2271 = vpop.f32.mrf.mxu0
          %v2272 = vadd.f32 %v2199, %v2271
          %v2273 = vpop.f32.mrf.mxu0
          %2274 = vdwg.mxu0
          %v2275 = vmax.f32 %v2272, 0.0
          %v2276 = vld [vmem:[%s11] sm:$0xff]
          %v2277 = vld [vmem:[%s11 + $0x8] sm:$0xff]
          %v2278 = vld [vmem:[%s11 + $0x10] sm:$0xff]
          %v2279 = vld [vmem:[%s11 + $0x18] sm:$0xff]
          %v2280 = vld [vmem:[%s12] sm:$0x1]
          %v2282 = vlaneseq
          %v2283 = vshrl.u32 %v2282, 7
          %v2284 = vsub.s32 0, %v2283
          %v2285 = vrot.slane %v2280, %v2284
          %vm2287 = vcmask 261120
          %v2289 = vsel %vm2287, %v2275, 0
          %2291 = vmatprep.subr.mxu0 0.0
          %2292 = vmatpush1.msra.mxu0 0.0
          %2293 = vmatprep.subr.mxu0 0.0
          %2294 = vmatpush1.msra.mxu0 0.0
          %2295 = vmatprep.subr.mxu0 0.0
          %2296 = vmatpush1.msra.mxu0 0.0
          %2297 = vmatprep.subr.mxu0 0.0
          %2298 = vmatpush1.msra.mxu0 0.0
          %2299 = vmatprep.subr.mxu0 0.0
          %2300 = vmatpush1.msra.mxu0 0.0
          %2301 = vmatprep.subr.mxu0 0.0
          %2302 = vmatpush1.msra.mxu0 0.0
          %2303 = vmatprep.subr.mxu0 0.0
          %2304 = vmatpush1.msra.mxu0 0.0
          %2305 = vmatprep.subr.mxu0 0.0
          %2306 = vmatpush1.msra.mxu0 0.0
          %2307 = vmatprep.subr.mxu0 0.0
          %2308 = vmatpush1.msra.mxu0 0.0
          %2309 = vmatprep.subr.mxu0 0.0
          %2310 = vmatpush1.msra.mxu0 0.0
          %2311 = vmatprep.subr.mxu0 0.0
          %2312 = vmatpush1.msra.mxu0 0.0
          %2313 = vmatprep.subr.mxu0 0.0
          %2314 = vmatpush1.msra.mxu0 0.0
          %2315 = vmatprep.subr.mxu0 0.0
          %2316 = vmatpush1.msra.mxu0 %v2279
          %2317 = vmatprep.subr.mxu0 0.0
          %2318 = vmatpush1.msra.mxu0 %v2278
          %2319 = vmatprep.subr.mxu0 0.0
          %2320 = vmatpush1.msra.mxu0 %v2277
          %2321 = vmatprep.subr.mxu0 0.0
          %2322 = vmatpush1.msra.mxu0 %v2276
          %2323 = vmatprep.subr.mxu0 0.0
          %2324 = vmatpush2.msra.mxu0 0.0
          %2325 = vmatprep.subr.mxu0 0.0
          %2326 = vmatpush2.msra.mxu0 0.0
          %2327 = vmatprep.subr.mxu0 0.0
          %2328 = vmatpush2.msra.mxu0 0.0
          %2329 = vmatprep.subr.mxu0 0.0
          %2330 = vmatpush2.msra.mxu0 0.0
          %2331 = vmatprep.subr.mxu0 0.0
          %2332 = vmatpush2.msra.mxu0 0.0
          %2333 = vmatprep.subr.mxu0 0.0
          %2334 = vmatpush2.msra.mxu0 0.0
          %2335 = vmatprep.subr.mxu0 0.0
          %2336 = vmatpush2.msra.mxu0 0.0
          %2337 = vmatprep.subr.mxu0 0.0
          %2338 = vmatpush2.msra.mxu0 0.0
          %2339 = vmatprep.subr.mxu0 0.0
          %2340 = vmatpush2.msra.mxu0 0.0
          %2341 = vmatprep.subr.mxu0 0.0
          %2342 = vmatpush2.msra.mxu0 0.0
          %2343 = vmatprep.subr.mxu0 0.0
          %2344 = vmatpush2.msra.mxu0 0.0
          %2345 = vmatprep.subr.mxu0 0.0
          %2346 = vmatpush2.msra.mxu0 0.0
          %2347 = vmatprep.subr.mxu0 0.0
          %2348 = vmatpush2.msra.mxu0 0.0
          %2349 = vmatprep.subr.mxu0 0.0
          %2350 = vmatpush2.msra.mxu0 0.0
          %2351 = vmatprep.subr.mxu0 0.0
          %2352 = vmatpush2.msra.mxu0 0.0
          %2353 = vmatprep.subr.mxu0 0.0
          %2354 = vmatpush2.msra.mxu0 0.0
          %2355 = vmatprep.mubr.f32.mxu0 0.0
          %2356 = vmatmul.mubr.f32.gmra.mxu0 %v2289
          %v2357 = vpop.f32.mrf.mxu0
          %v2358 = vadd.f32 %v2285, %v2357
          %v2359 = vpop.f32.mrf.mxu0
          %2360 = vdwg.mxu0
          %vm2361 = vcmask 60416
          %2362 = vst.msk [vmem:[#allocation14] sm:$0xf] %vm2361, %v2358
        $region116: #{tpu_custom_call.1} parent=71 // pred_fallthru
          _
        // Predicated region
        $region117: #{tpu_custom_call.1} parent=71 // pred_check
          %p2363 = pneg %p348
        $region118: #{tpu_custom_call.1} parent=71 // pred_check_branch
          %2365 = sbr.rel (%p2363) target = $region120
        $region119: #{tpu_custom_call.1} parent=71 // pred_region
          %s2367 = ssub.s32 64, 64
          %2368 = vsyncadd [#allocation7], %s2367
          %s2370 = sshll.u32 [#allocation14], 4
          %s2371 = int_to_ptr.vmem [resolvable:$true] %s2370
          %2373 = dma.vmem_to_hbm [thread:$0]  %s2371, 64, %s13, [#allocation7]
        $region120: #{tpu_custom_call.1} parent=71 // pred_fallthru
          _
        // Predicated region
        $region121: #{tpu_custom_call.1} parent=71 // pred_check
          %p2374 = pneg %p348
        $region122: #{tpu_custom_call.1} parent=71 // pred_check_branch
          %2376 = sbr.rel (%p2374) target = $region124
        $region123: #{tpu_custom_call.1} parent=71 // pred_region
          %2377 = dma.done [#allocation7], 64
        $region124: #{tpu_custom_call.1} parent=71 // pred_fallthru
          _
      $region72: #{tpu_custom_call.1} parent=5 // pred_fallthru
        _
      %p2378 = scmp.le.s32.totalorder 2, %s25
      // Predicated region
      $region125: #{tpu_custom_call.1} parent=5 // pred_check
        %p2379 = pneg %p2378
      $region126: #{tpu_custom_call.1} parent=5 // pred_check_branch
        %2381 = sbr.rel (%p2379) target = $region128
      $region127: #{tpu_custom_call.1} parent=5 // pred_region
        %s2382 = ssub.s32 %s25, 2
      $region128: #{tpu_custom_call.1} parent=5 // pred_fallthru
        _
    $region6: #{tpu_custom_call.1} parent=1 // loop_footer
      %s29 = sadd.s32 1, %s25
    $region7: #{tpu_custom_call.1} parent=1 // loop_footer_branch
      %24 = sbr.rel target = $region3
    $region8: #{tpu_custom_call.1} parent=1 // loop_exit
      _
    %2383 = vsyncpa [#allocation6], 1
    %s2384 = scalar_lea.sflag [#allocation6], 1
    %2385 = vsyncpa %s2384, 1
    %2386 = vsyncpa [#allocation9], 1
    %2387 = vsyncpa [#allocation12], 1
    %2388 = vsyncpa [#allocation7], 1
    %s2389 = scalar_lea.sflag [#allocation7], 1
    %2390 = vsyncpa %s2389, 1

</llo_original>
